<compile_context>
chip_gen: v7x
topology: tpu7x:2x2x1
jax: 0.10.0
libtpu: 0.0.40
codegen_flags: <defaults>
</compile_context>

<pallas_src>
import functools

import numpy as np

import jax
import jax.numpy as jnp
from jax.experimental import pallas as pl
from jax.experimental.pallas import tpu as pltpu

EPS = 1e-5


# ----------------------------------------------------------------------------
# In-kernel helpers
# ----------------------------------------------------------------------------
def _bn_rows(y, g, b):
    """Training-mode BatchNorm of a (C, M) tile over the lane (M) axis."""
    mu = jnp.mean(y, axis=1, keepdims=True)
    var = jnp.mean(jnp.square(y - mu), axis=1, keepdims=True)
    return (y - mu) * jax.lax.rsqrt(var + EPS) * g + b


# ----------------------------------------------------------------------------
# Fused Bottleneck kernel
# ----------------------------------------------------------------------------
def _bottleneck_kernel(xt_ref, sel_ref, w1_ref, w2_ref, wl_ref, gb_ref, out_ref,
                       *, downsample, cmid, cout, lo):
    f32, bf16 = jnp.float32, jnp.bfloat16

    gb = gb_ref[...]                       # (Ctot, 2) packed [gamma, beta]
    x_bf = xt_ref[...].astype(bf16)        # (Cin, L)
    sel = sel_ref[...]                     # (L, 9*Lo) bf16 one-hot gather

    # ---- conv1 (1x1) + bn1 + relu : (Cmid, L)
    h1 = jnp.dot(w1_ref[...], x_bf, preferred_element_type=f32)
    h1 = jnp.maximum(_bn_rows(h1, gb[0:cmid, 0:1], gb[0:cmid, 1:2]), 0.0)
    h1_bf = h1.astype(bf16)

    # ---- conv2 (3x3, stride, pad=1) + bn2 + relu
    # One gather matmul against the precomputed Sel, then one tap-weight
    # matmul.  G[c, t*Lo + j] = h1[c, src(t, j)]  (0 for padded taps).
    g = jnp.dot(h1_bf, sel, preferred_element_type=f32)          # (Cmid, 9*Lo)
    g_bf = g.astype(bf16)                                        # lossless (0/1 select)
    # Reorder (Cmid, 9*Lo) -> (9*Cmid, Lo) via 9 static lane slices
    # (row t*Cmid + c <- G[c, t*Lo:(t+1)*Lo]); tiny sublane copies.
    g_r = jnp.concatenate([g_bf[:, t * lo:(t + 1) * lo] for t in range(9)],
                          axis=0)                                # (9*Cmid, Lo)
    h2 = jnp.dot(w2_ref[...], g_r, preferred_element_type=f32)   # (Cmid, Lo)
    h2 = jnp.maximum(_bn_rows(h2, gb[cmid:2 * cmid, 0:1],
                              gb[cmid:2 * cmid, 1:2]), 0.0)
    h2_bf = h2.astype(bf16)

    if downsample:
        # ---- strided identity gather via the center tap (t=4: kh=kw=1)
        xs = jnp.dot(x_bf, sel[:, 4 * lo:5 * lo],
                     preferred_element_type=f32)                 # (Cin, Lo)
        hcat = jnp.concatenate([h2_bf, xs.astype(bf16)], axis=0) # (Cmid+Cin, Lo)
        # ---- conv3 + downsample-conv as ONE block-diagonal matmul, then
        #      bn3 + bnd as ONE stacked per-row BN.
        y = jnp.dot(wl_ref[...], hcat, preferred_element_type=f32)  # (2*Cout, Lo)
        y = _bn_rows(y, gb[2 * cmid:2 * cmid + 2 * cout, 0:1],
                     gb[2 * cmid:2 * cmid + 2 * cout, 1:2])
        out_ref[...] = jnp.maximum(y[:cout] + y[cout:], 0.0)
    else:
        # ---- conv3 (1x1) + bn3, identity = x
        h3 = jnp.dot(wl_ref[...], h2_bf, preferred_element_type=f32)
        h3 = _bn_rows(h3, gb[2 * cmid:2 * cmid + cout, 0:1],
                      gb[2 * cmid:2 * cmid + cout, 1:2])
        out_ref[...] = jnp.maximum(h3 + xt_ref[...], 0.0)


# ----------------------------------------------------------------------------
# Host-side layout plumbing (Sel construction, weight flattening, specs)
# ----------------------------------------------------------------------------
def _make_sel(N, H, W, Ho, Wo, stride):
    """One-hot gather matrix Sel (L, 9*Lo) bf16.

    Sel[i, t*Lo + j] = 1  iff  flat input position i is the source of tap
    t = kh*3 + kw for output position j of a 3x3/stride/pad=1 conv
    (zero-padding taps produce all-zero columns).
    """
    L, Lo = N * H * W, N * Ho * Wo
    n = np.arange(N)[:, None, None]
    ho = np.arange(Ho)[None, :, None]
    wo = np.arange(Wo)[None, None, :]
    sel = np.zeros((L, 9 * Lo), np.float32)
    cols = np.arange(Lo)
    for kh in range(3):
        for kw in range(3):
            t = kh * 3 + kw
            hi = ho * stride + kh - 1
            wi = wo * stride + kw - 1
            valid = (hi >= 0) & (hi < H) & (wi >= 0) & (wi < W)
            src = (n * H + hi) * W + wi
            src = np.where(valid, src, -1)
            src = np.broadcast_to(src, (N, Ho, Wo)).reshape(-1)
            m = src >= 0
            sel[src[m], t * Lo + cols[m]] = 1.0
    return jnp.asarray(sel, dtype=jnp.bfloat16)


def _full_spec(arr):
    nd = arr.ndim
    return pl.BlockSpec(arr.shape, lambda *_: (0,) * nd)


# ----------------------------------------------------------------------------
# Bottleneck forward
# ----------------------------------------------------------------------------
def bottleneck_forward(x_nchw, params, *, stride, downsample):
    x = x_nchw.astype(jnp.float32)
    N, Cin, H, W = x.shape
    Cmid = params["w1"].shape[0]
    Cout = 4 * Cmid
    Ho = (H + 2 - 3) // stride + 1
    Wo = (W + 2 - 3) // stride + 1
    L, Lo = N * H * W, N * Ho * Wo

    # Lane-dense transposed activation layout: (C, N*H*W).
    xt = x.transpose(1, 0, 2, 3).reshape(Cin, L)
    sel = _make_sel(N, H, W, Ho, Wo, stride)

    # W2f[co, t*Cmid + c] = w2[t, co, c]  (matches the in-kernel slice order).
    w2f = params["w2"].transpose(1, 0, 2).reshape(Cmid, 9 * Cmid)

    if downsample:
        w3, wd = params["w3"], params["wd"]
        w_last = jnp.concatenate(
            [jnp.concatenate([w3, jnp.zeros((Cout, Cin), w3.dtype)], axis=1),
             jnp.concatenate([jnp.zeros((Cout, Cmid), wd.dtype), wd], axis=1)],
            axis=0)                                   # (2*Cout, Cmid+Cin)
        gammas = jnp.concatenate(
            [params["g1"], params["g2"], params["g3"], params["gd"]], axis=0)
        betas = jnp.concatenate(
            [params["b1"], params["b2"], params["b3"], params["bd"]], axis=0)
    else:
        assert stride == 1 and Cin == Cout, (
            "identity path without downsample requires stride==1 and Cin==4*Cmid")
        w_last = params["w3"]                         # (Cout, Cmid)
        gammas = jnp.concatenate(
            [params["g1"], params["g2"], params["g3"]], axis=0)
        betas = jnp.concatenate(
            [params["b1"], params["b2"], params["b3"]], axis=0)
    gb = jnp.concatenate([gammas, betas], axis=1)     # (Ctot, 2) f32

    args = [xt, sel, params["w1"], w2f, w_last, gb]

    # Cost estimate ~ actual MXU work executed in the kernel.
    flops = 2 * (Cmid * Cin * L            # conv1
                 + Cmid * L * (9 * Lo)     # gather matmul
                 + Cmid * (9 * Cmid) * Lo  # tap-weight matmul
                 + ((Cin * L * Lo          # strided-identity gather
                     + (2 * Cout) * (Cmid + Cin) * Lo)  # block-diag conv3+ds
                    if downsample else Cout * Cmid * Lo))
    transc = 2 * Cmid + (2 * Cout if downsample else Cout)   # one rsqrt per BN row
    bytes_accessed = (sum(int(a.size) * a.dtype.itemsize for a in args)
                      + Cout * Lo * 4)
    cost = pl.CostEstimate(flops=int(flops), transcendentals=int(transc),
                           bytes_accessed=int(bytes_accessed))

    kernel = functools.partial(_bottleneck_kernel, downsample=downsample,
                               cmid=Cmid, cout=Cout, lo=Lo)

    out_t = pl.pallas_call(
        kernel,
        out_shape=jax.ShapeDtypeStruct((Cout, Lo), jnp.float32),
        in_specs=[_full_spec(a) for a in args],
        out_specs=pl.BlockSpec((Cout, Lo), lambda *_: (0, 0)),
        cost_estimate=cost,
        compiler_params=pltpu.CompilerParams(vmem_limit_bytes=32 * 1024 * 1024),
    )(*args)

    # (Cout, N*Ho*Wo) -> NCHW
    return out_t.reshape(Cout, N, Ho, Wo).transpose(1, 0, 2, 3)


# ----------------------------------------------------------------------------
# Deterministic parameter init (shapes from Bottleneck.__init__)
#   w1: (Cmid, Cin)   w2: (9, Cmid, Cmid) with t = kh*3 + kw
#   w3: (4*Cmid, Cmid)   wd: (4*Cmid, Cin)        (all bf16, matmul layout)
# BN params at PyTorch default init: gamma=1, beta=0, shape (C, 1).
# ----------------------------------------------------------------------------
def init_params(key, in_channels, out_channels):
    expansion = 4
    cmid, cout = out_channels, expansion * out_channels
    k1, k2, k3, kd = jax.random.split(key, 4)

    def w(k, shape):
        return (0.1 * jax.random.normal(k, shape, jnp.float32)).astype(jnp.bfloat16)

    return {
        "w1": w(k1, (cmid, in_channels)),
        "w2": w(k2, (9, cmid, cmid)),
        "w3": w(k3, (cout, cmid)),
        "wd": w(kd, (cout, in_channels)),
        "g1": jnp.ones((cmid, 1), jnp.float32), "b1": jnp.zeros((cmid, 1), jnp.float32),
        "g2": jnp.ones((cmid, 1), jnp.float32), "b2": jnp.zeros((cmid, 1), jnp.float32),
        "g3": jnp.ones((cout, 1), jnp.float32), "b3": jnp.zeros((cout, 1), jnp.float32),
        "gd": jnp.ones((cout, 1), jnp.float32), "bd": jnp.zeros((cout, 1), jnp.float32),
    }


# ----------------------------------------------------------------------------
# Pure-JAX f32 reference (same math as the PyTorch module in training mode)
# ----------------------------------------------------------------------------
def _reference(x, params, *, stride, downsample):
    f32 = jnp.float32

    def conv(z, w_oihw, s=1, p=0):
        return jax.lax.conv_general_dilated(
            z, w_oihw, window_strides=(s, s), padding=[(p, p), (p, p)],
            dimension_numbers=("NCHW", "OIHW", "NCHW"))

    def bn(z):
        mu = z.mean(axis=(0, 2, 3), keepdims=True)
        var = jnp.square(z - mu).mean(axis=(0, 2, 3), keepdims=True)
        return (z - mu) * jax.lax.rsqrt(var + EPS)

    cmid = params["w2"].shape[1]
    w1 = params["w1"].astype(f32)[:, :, None, None]
    w2 = params["w2"].astype(f32).reshape(3, 3, cmid, cmid).transpose(2, 3, 0, 1)
    w3 = params["w3"].astype(f32)[:, :, None, None]

    h = jax.nn.relu(bn(conv(x, w1)))
    h = jax.nn.relu(bn(conv(h, w2, s=stride, p=1)))
    h = bn(conv(h, w3))
    if downsample:
        wd = params["wd"].astype(f32)[:, :, None, None]
        idn = bn(conv(x, wd, s=stride))
    else:
        idn = x
    return jax.nn.relu(h + idn)


if __name__ == "__main__":
    # Bottleneck(in_channels=8, out_channels=4, stride=2, downsample=True)
    in_channels, out_channels, stride = 8, 4, 2
    key = jax.random.PRNGKey(0)
    kx, kp = jax.random.split(key)
    x = jax.random.normal(kx, (2, in_channels, 16, 16), jnp.float32)  # NCHW

    params = init_params(kp, in_channels, out_channels)
    y = bottleneck_forward(x, params, stride=stride, downsample=True)
    y = jax.block_until_ready(y)

    assert y.shape == (2, 4 * out_channels, 8, 8), y.shape
    assert bool(jnp.all(jnp.isfinite(y)))
    assert bool(jnp.all(y >= 0.0))  # final ReLU

    # Numerical check vs. f32 reference (kernel uses bf16 MXU operands).
    y_ref = _reference(x, params, stride=stride, downsample=True)
    max_err = float(jnp.max(jnp.abs(y - y_ref)))
    assert max_err < 0.1, f"max abs err vs f32 reference = {max_err}"

    print("KERNEL_OK")
</pallas_src>

<mosaic_0001>
module attributes {stable_mosaic.version = 11 : i64} {
  func.func @_bottleneck_kernel(%arg0: memref<8x512xf32, #tpu.memory_space<vmem>>, %arg1: memref<512x1152xbf16, #tpu.memory_space<vmem>>, %arg2: memref<4x8xbf16, #tpu.memory_space<vmem>>, %arg3: memref<4x36xbf16, #tpu.memory_space<vmem>>, %arg4: memref<32x12xbf16, #tpu.memory_space<vmem>>, %arg5: memref<40x2xf32, #tpu.memory_space<vmem>>, %arg6: memref<16x128xf32, #tpu.memory_space<vmem>>) attributes {dimension_semantics = [], scalar_prefetch = 0 : i64, scratch_operands = 0 : i64, tpu.core_type = #tpu.core_type<tc>} {
    %c0 = arith.constant 0 : index
    %c0_0 = arith.constant 0 : index
    %0 = vector.load %arg5[%c0, %c0_0] : memref<40x2xf32, #tpu.memory_space<vmem>>, vector<40x2xf32>
    %c0_1 = arith.constant 0 : index
    %c0_2 = arith.constant 0 : index
    %1 = vector.load %arg0[%c0_1, %c0_2] : memref<8x512xf32, #tpu.memory_space<vmem>>, vector<8x512xf32>
    %2 = arith.truncf %1 : vector<8x512xf32> to vector<8x512xbf16>
    %c0_3 = arith.constant 0 : index
    %c0_4 = arith.constant 0 : index
    %3 = vector.load %arg1[%c0_3, %c0_4] : memref<512x1152xbf16, #tpu.memory_space<vmem>>, vector<512x1152xbf16>
    %c0_5 = arith.constant 0 : index
    %c0_6 = arith.constant 0 : index
    %4 = vector.load %arg2[%c0_5, %c0_6] : memref<4x8xbf16, #tpu.memory_space<vmem>>, vector<4x8xbf16>
    %cst = arith.constant dense<0.000000e+00> : vector<4x512xf32>
    %5 = tpu.matmul %4, %2, %cst {dimension_numbers = #tpu.dot_dimension_numbers<[1], [0], [0], [1], [0, 0, 1, 1], [], []>} : vector<4x8xbf16>, vector<8x512xbf16>, vector<4x512xf32> -> vector<4x512xf32>
    %6 = vector.extract_strided_slice %0 {offsets = [0, 0], sizes = [4, 1], strides = [1, 1]} : vector<40x2xf32> to vector<4x1xf32>
    %7 = vector.extract_strided_slice %0 {offsets = [0, 1], sizes = [4, 1], strides = [1, 1]} : vector<40x2xf32> to vector<4x1xf32>
    %cst_7 = arith.constant dense<0.000000e+00> : vector<4xf32>
    %8 = vector.multi_reduction <add>, %5, %cst_7 [1] : vector<4x512xf32> to vector<4xf32>
    %9 = vector.shape_cast %8 : vector<4xf32> to vector<4x1xf32>
    %cst_8 = arith.constant 5.120000e+02 : f32
    %10 = vector.broadcast %cst_8 : f32 to vector<4x1xf32>
    %11 = arith.divf %9, %10 : vector<4x1xf32>
    %12 = vector.broadcast %11 : vector<4x1xf32> to vector<4x512xf32>
    %13 = arith.subf %5, %12 : vector<4x512xf32>
    %14 = arith.mulf %13, %13 : vector<4x512xf32>
    %cst_9 = arith.constant dense<0.000000e+00> : vector<4xf32>
    %15 = vector.multi_reduction <add>, %14, %cst_9 [1] : vector<4x512xf32> to vector<4xf32>
    %16 = vector.shape_cast %15 : vector<4xf32> to vector<4x1xf32>
    %cst_10 = arith.constant 5.120000e+02 : f32
    %17 = vector.broadcast %cst_10 : f32 to vector<4x1xf32>
    %18 = arith.divf %16, %17 : vector<4x1xf32>
    %19 = vector.broadcast %11 : vector<4x1xf32> to vector<4x512xf32>
    %20 = arith.subf %5, %19 : vector<4x512xf32>
    %cst_11 = arith.constant 9.99999974E-6 : f32
    %21 = vector.broadcast %cst_11 : f32 to vector<4x1xf32>
    %22 = arith.addf %18, %21 : vector<4x1xf32>
    %23 = math.rsqrt %22 : vector<4x1xf32>
    %24 = vector.broadcast %23 : vector<4x1xf32> to vector<4x512xf32>
    %25 = arith.mulf %20, %24 : vector<4x512xf32>
    %26 = vector.broadcast %6 : vector<4x1xf32> to vector<4x512xf32>
    %27 = arith.mulf %25, %26 : vector<4x512xf32>
    %28 = vector.broadcast %7 : vector<4x1xf32> to vector<4x512xf32>
    %29 = arith.addf %27, %28 : vector<4x512xf32>
    %cst_12 = arith.constant 0.000000e+00 : f32
    %30 = vector.broadcast %cst_12 : f32 to vector<4x512xf32>
    %31 = arith.maximumf %29, %30 : vector<4x512xf32>
    %32 = arith.truncf %31 : vector<4x512xf32> to vector<4x512xbf16>
    %cst_13 = arith.constant dense<0.000000e+00> : vector<4x1152xf32>
    %33 = tpu.matmul %32, %3, %cst_13 {dimension_numbers = #tpu.dot_dimension_numbers<[1], [0], [0], [1], [0, 0, 1, 1], [], []>} : vector<4x512xbf16>, vector<512x1152xbf16>, vector<4x1152xf32> -> vector<4x1152xf32>
    %34 = arith.truncf %33 : vector<4x1152xf32> to vector<4x1152xbf16>
    %35 = vector.extract_strided_slice %34 {offsets = [0, 0], sizes = [4, 128], strides = [1, 1]} : vector<4x1152xbf16> to vector<4x128xbf16>
    %36 = vector.extract_strided_slice %34 {offsets = [0, 128], sizes = [4, 128], strides = [1, 1]} : vector<4x1152xbf16> to vector<4x128xbf16>
    %37 = vector.extract_strided_slice %34 {offsets = [0, 256], sizes = [4, 128], strides = [1, 1]} : vector<4x1152xbf16> to vector<4x128xbf16>
    %38 = vector.extract_strided_slice %34 {offsets = [0, 384], sizes = [4, 128], strides = [1, 1]} : vector<4x1152xbf16> to vector<4x128xbf16>
    %39 = vector.extract_strided_slice %34 {offsets = [0, 512], sizes = [4, 128], strides = [1, 1]} : vector<4x1152xbf16> to vector<4x128xbf16>
    %40 = vector.extract_strided_slice %34 {offsets = [0, 640], sizes = [4, 128], strides = [1, 1]} : vector<4x1152xbf16> to vector<4x128xbf16>
    %41 = vector.extract_strided_slice %34 {offsets = [0, 768], sizes = [4, 128], strides = [1, 1]} : vector<4x1152xbf16> to vector<4x128xbf16>
    %42 = vector.extract_strided_slice %34 {offsets = [0, 896], sizes = [4, 128], strides = [1, 1]} : vector<4x1152xbf16> to vector<4x128xbf16>
    %43 = vector.extract_strided_slice %34 {offsets = [0, 1024], sizes = [4, 128], strides = [1, 1]} : vector<4x1152xbf16> to vector<4x128xbf16>
    %44 = tpu.concatenate %35, %36, %37, %38, %39, %40, %41, %42, %43 in 0 : vector<4x128xbf16>, vector<4x128xbf16>, vector<4x128xbf16>, vector<4x128xbf16>, vector<4x128xbf16>, vector<4x128xbf16>, vector<4x128xbf16>, vector<4x128xbf16>, vector<4x128xbf16> -> vector<36x128xbf16>
    %c0_14 = arith.constant 0 : index
    %c0_15 = arith.constant 0 : index
    %45 = vector.load %arg3[%c0_14, %c0_15] : memref<4x36xbf16, #tpu.memory_space<vmem>>, vector<4x36xbf16>
    %cst_16 = arith.constant dense<0.000000e+00> : vector<4x128xf32>
    %46 = tpu.matmul %45, %44, %cst_16 {dimension_numbers = #tpu.dot_dimension_numbers<[1], [0], [0], [1], [0, 0, 1, 1], [], []>} : vector<4x36xbf16>, vector<36x128xbf16>, vector<4x128xf32> -> vector<4x128xf32>
    %47 = vector.extract_strided_slice %0 {offsets = [4, 0], sizes = [4, 1], strides = [1, 1]} : vector<40x2xf32> to vector<4x1xf32>
    %48 = vector.extract_strided_slice %0 {offsets = [4, 1], sizes = [4, 1], strides = [1, 1]} : vector<40x2xf32> to vector<4x1xf32>
    %cst_17 = arith.constant dense<0.000000e+00> : vector<4xf32>
    %49 = vector.multi_reduction <add>, %46, %cst_17 [1] : vector<4x128xf32> to vector<4xf32>
    %50 = vector.shape_cast %49 : vector<4xf32> to vector<4x1xf32>
    %cst_18 = arith.constant 1.280000e+02 : f32
    %51 = vector.broadcast %cst_18 : f32 to vector<4x1xf32>
    %52 = arith.divf %50, %51 : vector<4x1xf32>
    %53 = vector.broadcast %52 : vector<4x1xf32> to vector<4x128xf32>
    %54 = arith.subf %46, %53 : vector<4x128xf32>
    %55 = arith.mulf %54, %54 : vector<4x128xf32>
    %cst_19 = arith.constant dense<0.000000e+00> : vector<4xf32>
    %56 = vector.multi_reduction <add>, %55, %cst_19 [1] : vector<4x128xf32> to vector<4xf32>
    %57 = vector.shape_cast %56 : vector<4xf32> to vector<4x1xf32>
    %cst_20 = arith.constant 1.280000e+02 : f32
    %58 = vector.broadcast %cst_20 : f32 to vector<4x1xf32>
    %59 = arith.divf %57, %58 : vector<4x1xf32>
    %60 = vector.broadcast %52 : vector<4x1xf32> to vector<4x128xf32>
    %61 = arith.subf %46, %60 : vector<4x128xf32>
    %cst_21 = arith.constant 9.99999974E-6 : f32
    %62 = vector.broadcast %cst_21 : f32 to vector<4x1xf32>
    %63 = arith.addf %59, %62 : vector<4x1xf32>
    %64 = math.rsqrt %63 : vector<4x1xf32>
    %65 = vector.broadcast %64 : vector<4x1xf32> to vector<4x128xf32>
    %66 = arith.mulf %61, %65 : vector<4x128xf32>
    %67 = vector.broadcast %47 : vector<4x1xf32> to vector<4x128xf32>
    %68 = arith.mulf %66, %67 : vector<4x128xf32>
    %69 = vector.broadcast %48 : vector<4x1xf32> to vector<4x128xf32>
    %70 = arith.addf %68, %69 : vector<4x128xf32>
    %cst_22 = arith.constant 0.000000e+00 : f32
    %71 = vector.broadcast %cst_22 : f32 to vector<4x128xf32>
    %72 = arith.maximumf %70, %71 : vector<4x128xf32>
    %73 = arith.truncf %72 : vector<4x128xf32> to vector<4x128xbf16>
    %74 = vector.extract_strided_slice %3 {offsets = [0, 512], sizes = [512, 128], strides = [1, 1]} : vector<512x1152xbf16> to vector<512x128xbf16>
    %cst_23 = arith.constant dense<0.000000e+00> : vector<8x128xf32>
    %75 = tpu.matmul %2, %74, %cst_23 {dimension_numbers = #tpu.dot_dimension_numbers<[1], [0], [0], [1], [0, 0, 1, 1], [], []>} : vector<8x512xbf16>, vector<512x128xbf16>, vector<8x128xf32> -> vector<8x128xf32>
    %76 = arith.truncf %75 : vector<8x128xf32> to vector<8x128xbf16>
    %77 = tpu.concatenate %73, %76 in 0 : vector<4x128xbf16>, vector<8x128xbf16> -> vector<12x128xbf16>
    %c0_24 = arith.constant 0 : index
    %c0_25 = arith.constant 0 : index
    %78 = vector.load %arg4[%c0_24, %c0_25] : memref<32x12xbf16, #tpu.memory_space<vmem>>, vector<32x12xbf16>
    %cst_26 = arith.constant dense<0.000000e+00> : vector<32x128xf32>
    %79 = tpu.matmul %78, %77, %cst_26 {dimension_numbers = #tpu.dot_dimension_numbers<[1], [0], [0], [1], [0, 0, 1, 1], [], []>} : vector<32x12xbf16>, vector<12x128xbf16>, vector<32x128xf32> -> vector<32x128xf32>
    %80 = vector.extract_strided_slice %0 {offsets = [8, 0], sizes = [32, 1], strides = [1, 1]} : vector<40x2xf32> to vector<32x1xf32>
    %81 = vector.extract_strided_slice %0 {offsets = [8, 1], sizes = [32, 1], strides = [1, 1]} : vector<40x2xf32> to vector<32x1xf32>
    %cst_27 = arith.constant dense<0.000000e+00> : vector<32xf32>
    %82 = vector.multi_reduction <add>, %79, %cst_27 [1] : vector<32x128xf32> to vector<32xf32>
    %83 = vector.shape_cast %82 : vector<32xf32> to vector<32x1xf32>
    %cst_28 = arith.constant 1.280000e+02 : f32
    %84 = vector.broadcast %cst_28 : f32 to vector<32x1xf32>
    %85 = arith.divf %83, %84 : vector<32x1xf32>
    %86 = vector.broadcast %85 : vector<32x1xf32> to vector<32x128xf32>
    %87 = arith.subf %79, %86 : vector<32x128xf32>
    %88 = arith.mulf %87, %87 : vector<32x128xf32>
    %cst_29 = arith.constant dense<0.000000e+00> : vector<32xf32>
    %89 = vector.multi_reduction <add>, %88, %cst_29 [1] : vector<32x128xf32> to vector<32xf32>
    %90 = vector.shape_cast %89 : vector<32xf32> to vector<32x1xf32>
    %cst_30 = arith.constant 1.280000e+02 : f32
    %91 = vector.broadcast %cst_30 : f32 to vector<32x1xf32>
    %92 = arith.divf %90, %91 : vector<32x1xf32>
    %93 = vector.broadcast %85 : vector<32x1xf32> to vector<32x128xf32>
    %94 = arith.subf %79, %93 : vector<32x128xf32>
    %cst_31 = arith.constant 9.99999974E-6 : f32
    %95 = vector.broadcast %cst_31 : f32 to vector<32x1xf32>
    %96 = arith.addf %92, %95 : vector<32x1xf32>
    %97 = math.rsqrt %96 : vector<32x1xf32>
    %98 = vector.broadcast %97 : vector<32x1xf32> to vector<32x128xf32>
    %99 = arith.mulf %94, %98 : vector<32x128xf32>
    %100 = vector.broadcast %80 : vector<32x1xf32> to vector<32x128xf32>
    %101 = arith.mulf %99, %100 : vector<32x128xf32>
    %102 = vector.broadcast %81 : vector<32x1xf32> to vector<32x128xf32>
    %103 = arith.addf %101, %102 : vector<32x128xf32>
    %104 = vector.extract_strided_slice %103 {offsets = [0, 0], sizes = [16, 128], strides = [1, 1]} : vector<32x128xf32> to vector<16x128xf32>
    %105 = vector.extract_strided_slice %103 {offsets = [16, 0], sizes = [16, 128], strides = [1, 1]} : vector<32x128xf32> to vector<16x128xf32>
    %106 = arith.addf %104, %105 : vector<16x128xf32>
    %cst_32 = arith.constant 0.000000e+00 : f32
    %107 = vector.broadcast %cst_32 : f32 to vector<16x128xf32>
    %108 = arith.maximumf %106, %107 : vector<16x128xf32>
    %c0_33 = arith.constant 0 : index
    %c0_34 = arith.constant 0 : index
    %109 = vector.load %arg6[%c0_33, %c0_34] : memref<16x128xf32, #tpu.memory_space<vmem>>, vector<16x128xf32>
    tpu.vector_store %arg6[%c0_33, %c0_34], %108 {strides = array<i32>} : memref<16x128xf32, #tpu.memory_space<vmem>>, vector<16x128xf32>,
    return
  }
}

</mosaic_0001>

<llo_original>
// kernel: tpu_custom_call.1
$region0: #{tpu_custom_call.1}
  #allocation0 [shape = 'u32[]', space=smem, size = 0x4, offset = 0x4, fixed_abs, tag = 'smem constant byte address 0x4 - core index']
  #allocation1 [shape = 'u32[144,128]{1,0:T(1,128)}', space=vmem, size = 0x12000, scoped, tag = 'internal scratch']
  %s0 = inlined_call_operand.hbm [shape: f32[8,512], index: 0, kind: input, shape index: {}]
  %s1 = inlined_call_operand.hbm [shape: bf16[512,1152], index: 1, kind: input, shape index: {}]
  %s2 = inlined_call_operand.hbm [shape: bf16[4,8], index: 2, kind: input, shape index: {}]
  %s3 = inlined_call_operand.hbm [shape: bf16[4,36], index: 3, kind: input, shape index: {}]
  %s4 = inlined_call_operand.vmem [shape: bf16[32,12], index: 4, kind: input, shape index: {}]
  %s5 = inlined_call_operand.vmem [shape: f32[40,2], index: 5, kind: input, shape index: {}]
  %s6 = inlined_call_operand.hbm [shape: f32[16,128], index: 6, kind: output, shape index: {}]
  %s7 = sld [smem:[#allocation0]]
  $region50: #{tpu_custom_call.1} parent=0
    _
  %s9 = ssub.s32 1, %s7
  %s10 = scalar_select 0, %s9, %s7
  $region1: #{tpu_custom_call.1} parent=0
    #allocation2 [shape = 'u8[16384]{0}', space=vmem, size = 0x4000, scoped, tag = 'input window, operand 0, single buffered']
    #allocation3 [shape = 's32[1]{0}', space=sflag, size = 0x4, scoped, tag = 'scoped memory for tpu_custom_call.1']
    #allocation4 [shape = 's32[1]{0}', space=sflag, size = 0x4, scoped, tag = 'scoped memory for tpu_custom_call.1']
    #allocation5 [shape = 'u8[1179648]{0}', space=vmem, size = 0x120000, scoped, tag = 'input window, operand 1, single buffered']
    #allocation6 [shape = 's32[1]{0}', space=sflag, size = 0x4, scoped, tag = 'scoped memory for tpu_custom_call.1']
    #allocation7 [shape = 'u8[1024]{0}', space=vmem, size = 0x400, scoped, tag = 'input window, operand 2, single buffered']
    #allocation8 [shape = 'u8[1024]{0}', space=vmem, size = 0x400, scoped, tag = 'input window, operand 3, single buffered']
    #allocation9 [shape = 's32[1]{0}', space=sflag, size = 0x4, scoped, tag = 'scoped memory for tpu_custom_call.1']
    #allocation10 [shape = 'u8[8192]{0}', space=vmem, size = 0x2000, scoped, tag = 'output window, operand 0, single buffered']
    %11 = vsyncpa [#allocation3], 0
    %12 = vsyncpa [#allocation6], 0
    %13 = vsyncpa [#allocation9], 0
    %14 = vsyncpa [#allocation4], 0
    // Predicated region
    $region2: #{tpu_custom_call.1} parent=1 // pred_check
      _
    $region3: #{tpu_custom_call.1} parent=1 // pred_check_branch
      %16 = sbr.rel (0) target = $region5
    $region4: #{tpu_custom_call.1} parent=1 // pred_region
      %s18 = ssub.s32 512, 512
      %19 = vsyncadd [#allocation3], %s18
      %s21 = sshll.u32 [#allocation2], 4
      %s22 = int_to_ptr.vmem [resolvable:$true] %s21
      %24 = dma.hbm_to_vmem [thread:$0]  %s0, 512, %s22, [#allocation3]
    $region5: #{tpu_custom_call.1} parent=1 // pred_fallthru
      _
    // Predicated region
    $region6: #{tpu_custom_call.1} parent=1 // pred_check
      _
    $region7: #{tpu_custom_call.1} parent=1 // pred_check_branch
      %26 = sbr.rel (0) target = $region9
    $region8: #{tpu_custom_call.1} parent=1 // pred_region
      %s28 = ssub.s32 36864, 36864
      %29 = vsyncadd [#allocation6], %s28
      %s30 = sshll.u32 [#allocation5], 4
      %s31 = int_to_ptr.vmem [resolvable:$true] %s30
      %36 = dma.hbm_to_vmem [thread:$0]  %s1, 36864, %s31, [#allocation6], 576, 576, 36
    $region9: #{tpu_custom_call.1} parent=1 // pred_fallthru
      _
    // Predicated region
    $region10: #{tpu_custom_call.1} parent=1 // pred_check
      _
    $region11: #{tpu_custom_call.1} parent=1 // pred_check_branch
      %38 = sbr.rel (0) target = $region13
    $region12: #{tpu_custom_call.1} parent=1 // pred_region
      %s40 = ssub.s32 32, 32
      %41 = vsyncadd [#allocation6], %s40
      %s43 = sshll.u32 [#allocation7], 4
      %s44 = int_to_ptr.vmem [resolvable:$true] %s43
      %46 = dma.hbm_to_vmem [thread:$0]  %s2, 32, %s44, [#allocation6]
    $region13: #{tpu_custom_call.1} parent=1 // pred_fallthru
      _
    // Predicated region
    $region14: #{tpu_custom_call.1} parent=1 // pred_check
      _
    $region15: #{tpu_custom_call.1} parent=1 // pred_check_branch
      %48 = sbr.rel (0) target = $region17
    $region16: #{tpu_custom_call.1} parent=1 // pred_region
      %s50 = ssub.s32 32, 32
      %51 = vsyncadd [#allocation9], %s50
      %s53 = sshll.u32 [#allocation8], 4
      %s54 = int_to_ptr.vmem [resolvable:$true] %s53
      %56 = dma.hbm_to_vmem [thread:$0]  %s3, 32, %s54, [#allocation9]
    $region17: #{tpu_custom_call.1} parent=1 // pred_fallthru
      _
    // Predicated region
    $region18: #{tpu_custom_call.1} parent=1 // pred_check
      _
    $region19: #{tpu_custom_call.1} parent=1 // pred_check_branch
      %58 = sbr.rel (0) target = $region21
    $region20: #{tpu_custom_call.1} parent=1 // pred_region
      _
    $region21: #{tpu_custom_call.1} parent=1 // pred_fallthru
      _
    // Predicated region
    $region22: #{tpu_custom_call.1} parent=1 // pred_check
      _
    $region23: #{tpu_custom_call.1} parent=1 // pred_check_branch
      %60 = sbr.rel (0) target = $region25
    $region24: #{tpu_custom_call.1} parent=1 // pred_region
      _
    $region25: #{tpu_custom_call.1} parent=1 // pred_fallthru
      _
    // Predicated region
    $region26: #{tpu_custom_call.1} parent=1 // pred_check
      _
    $region27: #{tpu_custom_call.1} parent=1 // pred_check_branch
      %62 = sbr.rel (0) target = $region29
    $region28: #{tpu_custom_call.1} parent=1 // pred_region
      %63 = dma.done [#allocation3], 512
    $region29: #{tpu_custom_call.1} parent=1 // pred_fallthru
      _
    // Predicated region
    $region30: #{tpu_custom_call.1} parent=1 // pred_check
      _
    $region31: #{tpu_custom_call.1} parent=1 // pred_check_branch
      %65 = sbr.rel (0) target = $region33
    $region32: #{tpu_custom_call.1} parent=1 // pred_region
      %66 = dma.done [#allocation6], 36864
    $region33: #{tpu_custom_call.1} parent=1 // pred_fallthru
      _
    // Predicated region
    $region34: #{tpu_custom_call.1} parent=1 // pred_check
      _
    $region35: #{tpu_custom_call.1} parent=1 // pred_check_branch
      %68 = sbr.rel (0) target = $region37
    $region36: #{tpu_custom_call.1} parent=1 // pred_region
      %69 = dma.done [#allocation6], 32
    $region37: #{tpu_custom_call.1} parent=1 // pred_fallthru
      _
    // Predicated region
    $region38: #{tpu_custom_call.1} parent=1 // pred_check
      _
    $region39: #{tpu_custom_call.1} parent=1 // pred_check_branch
      %71 = sbr.rel (0) target = $region41
    $region40: #{tpu_custom_call.1} parent=1 // pred_region
      %72 = dma.done [#allocation9], 32
    $region41: #{tpu_custom_call.1} parent=1 // pred_fallthru
      _
    %v74 = vld [vmem:[%s5] sm:$0xff]
    %v75 = vld [vmem:[%s5 + $0x8] sm:$0xff]
    %v76 = vld [vmem:[%s5 + $0x10] sm:$0xff]
    %v77 = vld [vmem:[%s5 + $0x18] sm:$0xff]
    %v78 = vld [vmem:[%s5 + $0x20] sm:$0xff]
    %v79 = vld [vmem:[#allocation2] sm:$0xff]
    %v80 = vld [vmem:[#allocation2 + $0x8] sm:$0xff]
    %v81 = vld [vmem:[#allocation2 + $0x10] sm:$0xff]
    %v82 = vld [vmem:[#allocation2 + $0x18] sm:$0xff]
    %v83 = vpack.c.bf16 %v79, %v79
    %v84 = vpack.c.bf16 %v80, %v80
    %v85 = vpack.c.bf16 %v81, %v81
    %v86 = vpack.c.bf16 %v82, %v82
    %v87 = vld [vmem:[#allocation5] sm:$0xff]
    %v88 = vld [vmem:[#allocation5 + $0x8] sm:$0xff]
    %v89 = vld [vmem:[#allocation5 + $0x10] sm:$0xff]
    %v90 = vld [vmem:[#allocation5 + $0x18] sm:$0xff]
    %v91 = vld [vmem:[#allocation5 + $0x20] sm:$0xf]
    %v92 = vld [vmem:[#allocation5 + $0x24] sm:$0xff]
    %v93 = vld [vmem:[#allocation5 + $0x2c] sm:$0xff]
    %v94 = vld [vmem:[#allocation5 + $0x34] sm:$0xff]
    %v95 = vld [vmem:[#allocation5 + $0x3c] sm:$0xff]
    %v96 = vld [vmem:[#allocation5 + $0x44] sm:$0xf]
    %v97 = vld [vmem:[#allocation5 + $0x48] sm:$0xff]
    %v98 = vld [vmem:[#allocation5 + $0x50] sm:$0xff]
    %v99 = vld [vmem:[#allocation5 + $0x58] sm:$0xff]
    %v100 = vld [vmem:[#allocation5 + $0x60] sm:$0xff]
    %v101 = vld [vmem:[#allocation5 + $0x68] sm:$0xf]
    %v102 = vld [vmem:[#allocation5 + $0x6c] sm:$0xff]
    %v103 = vld [vmem:[#allocation5 + $0x74] sm:$0xff]
    %v104 = vld [vmem:[#allocation5 + $0x7c] sm:$0xff]
    %v105 = vld [vmem:[#allocation5 + $0x84] sm:$0xff]
    %v106 = vld [vmem:[#allocation5 + $0x8c] sm:$0xf]
    %v107 = vld [vmem:[#allocation5 + $0x90] sm:$0xff]
    %v108 = vld [vmem:[#allocation5 + $0x98] sm:$0xff]
    %v109 = vld [vmem:[#allocation5 + $0xa0] sm:$0xff]
    %v110 = vld [vmem:[#allocation5 + $0xa8] sm:$0xff]
    %v111 = vld [vmem:[#allocation5 + $0xb0] sm:$0xf]
    %v112 = vld [vmem:[#allocation5 + $0xb4] sm:$0xff]
    %v113 = vld [vmem:[#allocation5 + $0xbc] sm:$0xff]
    %v114 = vld [vmem:[#allocation5 + $0xc4] sm:$0xff]
    %v115 = vld [vmem:[#allocation5 + $0xcc] sm:$0xff]
    %v116 = vld [vmem:[#allocation5 + $0xd4] sm:$0xf]
    %v117 = vld [vmem:[#allocation5 + $0xd8] sm:$0xff]
    %v118 = vld [vmem:[#allocation5 + $0xe0] sm:$0xff]
    %v119 = vld [vmem:[#allocation5 + $0xe8] sm:$0xff]
    %v120 = vld [vmem:[#allocation5 + $0xf0] sm:$0xff]
    %v121 = vld [vmem:[#allocation5 + $0xf8] sm:$0xf]
    %v122 = vld [vmem:[#allocation5 + $0xfc] sm:$0xff]
    %v123 = vld [vmem:[#allocation5 + $0x104] sm:$0xff]
    %v124 = vld [vmem:[#allocation5 + $0x10c] sm:$0xff]
    %v125 = vld [vmem:[#allocation5 + $0x114] sm:$0xff]
    %v126 = vld [vmem:[#allocation5 + $0x11c] sm:$0xf]
    %v127 = vld [vmem:[#allocation5 + $0x120] sm:$0xff]
    %v128 = vld [vmem:[#allocation5 + $0x128] sm:$0xff]
    %v129 = vld [vmem:[#allocation5 + $0x130] sm:$0xff]
    %v130 = vld [vmem:[#allocation5 + $0x138] sm:$0xff]
    %v131 = vld [vmem:[#allocation5 + $0x140] sm:$0xf]
    %v132 = vld [vmem:[#allocation5 + $0x144] sm:$0xff]
    %v133 = vld [vmem:[#allocation5 + $0x14c] sm:$0xff]
    %v134 = vld [vmem:[#allocation5 + $0x154] sm:$0xff]
    %v135 = vld [vmem:[#allocation5 + $0x15c] sm:$0xff]
    %v136 = vld [vmem:[#allocation5 + $0x164] sm:$0xf]
    %v137 = vld [vmem:[#allocation5 + $0x168] sm:$0xff]
    %v138 = vld [vmem:[#allocation5 + $0x170] sm:$0xff]
    %v139 = vld [vmem:[#allocation5 + $0x178] sm:$0xff]
    %v140 = vld [vmem:[#allocation5 + $0x180] sm:$0xff]
    %v141 = vld [vmem:[#allocation5 + $0x188] sm:$0xf]
    %v142 = vld [vmem:[#allocation5 + $0x18c] sm:$0xff]
    %v143 = vld [vmem:[#allocation5 + $0x194] sm:$0xff]
    %v144 = vld [vmem:[#allocation5 + $0x19c] sm:$0xff]
    %v145 = vld [vmem:[#allocation5 + $0x1a4] sm:$0xff]
    %v146 = vld [vmem:[#allocation5 + $0x1ac] sm:$0xf]
    %v147 = vld [vmem:[#allocation5 + $0x1b0] sm:$0xff]
    %v148 = vld [vmem:[#allocation5 + $0x1b8] sm:$0xff]
    %v149 = vld [vmem:[#allocation5 + $0x1c0] sm:$0xff]
    %v150 = vld [vmem:[#allocation5 + $0x1c8] sm:$0xff]
    %v151 = vld [vmem:[#allocation5 + $0x1d0] sm:$0xf]
    %v152 = vld [vmem:[#allocation5 + $0x1d4] sm:$0xff]
    %v153 = vld [vmem:[#allocation5 + $0x1dc] sm:$0xff]
    %v154 = vld [vmem:[#allocation5 + $0x1e4] sm:$0xff]
    %v155 = vld [vmem:[#allocation5 + $0x1ec] sm:$0xff]
    %v156 = vld [vmem:[#allocation5 + $0x1f4] sm:$0xf]
    %v157 = vld [vmem:[#allocation5 + $0x1f8] sm:$0xff]
    %v158 = vld [vmem:[#allocation5 + $0x200] sm:$0xff]
    %v159 = vld [vmem:[#allocation5 + $0x208] sm:$0xff]
    %v160 = vld [vmem:[#allocation5 + $0x210] sm:$0xff]
    %v161 = vld [vmem:[#allocation5 + $0x218] sm:$0xf]
    %v162 = vld [vmem:[#allocation5 + $0x21c] sm:$0xff]
    %v163 = vld [vmem:[#allocation5 + $0x224] sm:$0xff]
    %v164 = vld [vmem:[#allocation5 + $0x22c] sm:$0xff]
    %v165 = vld [vmem:[#allocation5 + $0x234] sm:$0xff]
    %v166 = vld [vmem:[#allocation5 + $0x23c] sm:$0xf]
    %v167 = vld [vmem:[#allocation5 + $0x240] sm:$0xff]
    %v168 = vld [vmem:[#allocation5 + $0x248] sm:$0xff]
    %v169 = vld [vmem:[#allocation5 + $0x250] sm:$0xff]
    %v170 = vld [vmem:[#allocation5 + $0x258] sm:$0xff]
    %v171 = vld [vmem:[#allocation5 + $0x260] sm:$0xf]
    %v172 = vld [vmem:[#allocation5 + $0x264] sm:$0xff]
    %v173 = vld [vmem:[#allocation5 + $0x26c] sm:$0xff]
    %v174 = vld [vmem:[#allocation5 + $0x274] sm:$0xff]
    %v175 = vld [vmem:[#allocation5 + $0x27c] sm:$0xff]
    %v176 = vld [vmem:[#allocation5 + $0x284] sm:$0xf]
    %v177 = vld [vmem:[#allocation5 + $0x288] sm:$0xff]
    %v178 = vld [vmem:[#allocation5 + $0x290] sm:$0xff]
    %v179 = vld [vmem:[#allocation5 + $0x298] sm:$0xff]
    %v180 = vld [vmem:[#allocation5 + $0x2a0] sm:$0xff]
    %v181 = vld [vmem:[#allocation5 + $0x2a8] sm:$0xf]
    %v182 = vld [vmem:[#allocation5 + $0x2ac] sm:$0xff]
    %v183 = vld [vmem:[#allocation5 + $0x2b4] sm:$0xff]
    %v184 = vld [vmem:[#allocation5 + $0x2bc] sm:$0xff]
    %v185 = vld [vmem:[#allocation5 + $0x2c4] sm:$0xff]
    %v186 = vld [vmem:[#allocation5 + $0x2cc] sm:$0xf]
    %v187 = vld [vmem:[#allocation5 + $0x2d0] sm:$0xff]
    %v188 = vld [vmem:[#allocation5 + $0x2d8] sm:$0xff]
    %v189 = vld [vmem:[#allocation5 + $0x2e0] sm:$0xff]
    %v190 = vld [vmem:[#allocation5 + $0x2e8] sm:$0xff]
    %v191 = vld [vmem:[#allocation5 + $0x2f0] sm:$0xf]
    %v192 = vld [vmem:[#allocation5 + $0x2f4] sm:$0xff]
    %v193 = vld [vmem:[#allocation5 + $0x2fc] sm:$0xff]
    %v194 = vld [vmem:[#allocation5 + $0x304] sm:$0xff]
    %v195 = vld [vmem:[#allocation5 + $0x30c] sm:$0xff]
    %v196 = vld [vmem:[#allocation5 + $0x314] sm:$0xf]
    %v197 = vld [vmem:[#allocation5 + $0x318] sm:$0xff]
    %v198 = vld [vmem:[#allocation5 + $0x320] sm:$0xff]
    %v199 = vld [vmem:[#allocation5 + $0x328] sm:$0xff]
    %v200 = vld [vmem:[#allocation5 + $0x330] sm:$0xff]
    %v201 = vld [vmem:[#allocation5 + $0x338] sm:$0xf]
    %v202 = vld [vmem:[#allocation5 + $0x33c] sm:$0xff]
    %v203 = vld [vmem:[#allocation5 + $0x344] sm:$0xff]
    %v204 = vld [vmem:[#allocation5 + $0x34c] sm:$0xff]
    %v205 = vld [vmem:[#allocation5 + $0x354] sm:$0xff]
    %v206 = vld [vmem:[#allocation5 + $0x35c] sm:$0xf]
    %v207 = vld [vmem:[#allocation5 + $0x360] sm:$0xff]
    %v208 = vld [vmem:[#allocation5 + $0x368] sm:$0xff]
    %v209 = vld [vmem:[#allocation5 + $0x370] sm:$0xff]
    %v210 = vld [vmem:[#allocation5 + $0x378] sm:$0xff]
    %v211 = vld [vmem:[#allocation5 + $0x380] sm:$0xf]
    %v212 = vld [vmem:[#allocation5 + $0x384] sm:$0xff]
    %v213 = vld [vmem:[#allocation5 + $0x38c] sm:$0xff]
    %v214 = vld [vmem:[#allocation5 + $0x394] sm:$0xff]
    %v215 = vld [vmem:[#allocation5 + $0x39c] sm:$0xff]
    %v216 = vld [vmem:[#allocation5 + $0x3a4] sm:$0xf]
    %v217 = vld [vmem:[#allocation5 + $0x3a8] sm:$0xff]
    %v218 = vld [vmem:[#allocation5 + $0x3b0] sm:$0xff]
    %v219 = vld [vmem:[#allocation5 + $0x3b8] sm:$0xff]
    %v220 = vld [vmem:[#allocation5 + $0x3c0] sm:$0xff]
    %v221 = vld [vmem:[#allocation5 + $0x3c8] sm:$0xf]
    %v222 = vld [vmem:[#allocation5 + $0x3cc] sm:$0xff]
    %v223 = vld [vmem:[#allocation5 + $0x3d4] sm:$0xff]
    %v224 = vld [vmem:[#allocation5 + $0x3dc] sm:$0xff]
    %v225 = vld [vmem:[#allocation5 + $0x3e4] sm:$0xff]
    %v226 = vld [vmem:[#allocation5 + $0x3ec] sm:$0xf]
    %v227 = vld [vmem:[#allocation5 + $0x3f0] sm:$0xff]
    %v228 = vld [vmem:[#allocation5 + $0x3f8] sm:$0xff]
    %v229 = vld [vmem:[#allocation5 + $0x400] sm:$0xff]
    %v230 = vld [vmem:[#allocation5 + $0x408] sm:$0xff]
    %v231 = vld [vmem:[#allocation5 + $0x410] sm:$0xf]
    %v232 = vld [vmem:[#allocation5 + $0x414] sm:$0xff]
    %v233 = vld [vmem:[#allocation5 + $0x41c] sm:$0xff]
    %v234 = vld [vmem:[#allocation5 + $0x424] sm:$0xff]
    %v235 = vld [vmem:[#allocation5 + $0x42c] sm:$0xff]
    %v236 = vld [vmem:[#allocation5 + $0x434] sm:$0xf]
    %v237 = vld [vmem:[#allocation5 + $0x438] sm:$0xff]
    %v238 = vld [vmem:[#allocation5 + $0x440] sm:$0xff]
    %v239 = vld [vmem:[#allocation5 + $0x448] sm:$0xff]
    %v240 = vld [vmem:[#allocation5 + $0x450] sm:$0xff]
    %v241 = vld [vmem:[#allocation5 + $0x458] sm:$0xf]
    %v242 = vld [vmem:[#allocation5 + $0x45c] sm:$0xff]
    %v243 = vld [vmem:[#allocation5 + $0x464] sm:$0xff]
    %v244 = vld [vmem:[#allocation5 + $0x46c] sm:$0xff]
    %v245 = vld [vmem:[#allocation5 + $0x474] sm:$0xff]
    %v246 = vld [vmem:[#allocation5 + $0x47c] sm:$0xf]
    %v247 = vld [vmem:[#allocation5 + $0x480] sm:$0xff]
    %v248 = vld [vmem:[#allocation5 + $0x488] sm:$0xff]
    %v249 = vld [vmem:[#allocation5 + $0x490] sm:$0xff]
    %v250 = vld [vmem:[#allocation5 + $0x498] sm:$0xff]
    %v251 = vld [vmem:[#allocation5 + $0x4a0] sm:$0xf]
    %v252 = vld [vmem:[#allocation5 + $0x4a4] sm:$0xff]
    %v253 = vld [vmem:[#allocation5 + $0x4ac] sm:$0xff]
    %v254 = vld [vmem:[#allocation5 + $0x4b4] sm:$0xff]
    %v255 = vld [vmem:[#allocation5 + $0x4bc] sm:$0xff]
    %v256 = vld [vmem:[#allocation5 + $0x4c4] sm:$0xf]
    %v257 = vld [vmem:[#allocation5 + $0x4c8] sm:$0xff]
    %v258 = vld [vmem:[#allocation5 + $0x4d0] sm:$0xff]
    %v259 = vld [vmem:[#allocation5 + $0x4d8] sm:$0xff]
    %v260 = vld [vmem:[#allocation5 + $0x4e0] sm:$0xff]
    %v261 = vld [vmem:[#allocation5 + $0x4e8] sm:$0xf]
    %v262 = vld [vmem:[#allocation5 + $0x4ec] sm:$0xff]
    %v263 = vld [vmem:[#allocation5 + $0x4f4] sm:$0xff]
    %v264 = vld [vmem:[#allocation5 + $0x4fc] sm:$0xff]
    %v265 = vld [vmem:[#allocation5 + $0x504] sm:$0xff]
    %v266 = vld [vmem:[#allocation5 + $0x50c] sm:$0xf]
    %v267 = vld [vmem:[#allocation5 + $0x510] sm:$0xff]
    %v268 = vld [vmem:[#allocation5 + $0x518] sm:$0xff]
    %v269 = vld [vmem:[#allocation5 + $0x520] sm:$0xff]
    %v270 = vld [vmem:[#allocation5 + $0x528] sm:$0xff]
    %v271 = vld [vmem:[#allocation5 + $0x530] sm:$0xf]
    %v272 = vld [vmem:[#allocation5 + $0x534] sm:$0xff]
    %v273 = vld [vmem:[#allocation5 + $0x53c] sm:$0xff]
    %v274 = vld [vmem:[#allocation5 + $0x544] sm:$0xff]
    %v275 = vld [vmem:[#allocation5 + $0x54c] sm:$0xff]
    %v276 = vld [vmem:[#allocation5 + $0x554] sm:$0xf]
    %v277 = vld [vmem:[#allocation5 + $0x558] sm:$0xff]
    %v278 = vld [vmem:[#allocation5 + $0x560] sm:$0xff]
    %v279 = vld [vmem:[#allocation5 + $0x568] sm:$0xff]
    %v280 = vld [vmem:[#allocation5 + $0x570] sm:$0xff]
    %v281 = vld [vmem:[#allocation5 + $0x578] sm:$0xf]
    %v282 = vld [vmem:[#allocation5 + $0x57c] sm:$0xff]
    %v283 = vld [vmem:[#allocation5 + $0x584] sm:$0xff]
    %v284 = vld [vmem:[#allocation5 + $0x58c] sm:$0xff]
    %v285 = vld [vmem:[#allocation5 + $0x594] sm:$0xff]
    %v286 = vld [vmem:[#allocation5 + $0x59c] sm:$0xf]
    %v287 = vld [vmem:[#allocation5 + $0x5a0] sm:$0xff]
    %v288 = vld [vmem:[#allocation5 + $0x5a8] sm:$0xff]
    %v289 = vld [vmem:[#allocation5 + $0x5b0] sm:$0xff]
    %v290 = vld [vmem:[#allocation5 + $0x5b8] sm:$0xff]
    %v291 = vld [vmem:[#allocation5 + $0x5c0] sm:$0xf]
    %v292 = vld [vmem:[#allocation5 + $0x5c4] sm:$0xff]
    %v293 = vld [vmem:[#allocation5 + $0x5cc] sm:$0xff]
    %v294 = vld [vmem:[#allocation5 + $0x5d4] sm:$0xff]
    %v295 = vld [vmem:[#allocation5 + $0x5dc] sm:$0xff]
    %v296 = vld [vmem:[#allocation5 + $0x5e4] sm:$0xf]
    %v297 = vld [vmem:[#allocation5 + $0x5e8] sm:$0xff]
    %v298 = vld [vmem:[#allocation5 + $0x5f0] sm:$0xff]
    %v299 = vld [vmem:[#allocation5 + $0x5f8] sm:$0xff]
    %v300 = vld [vmem:[#allocation5 + $0x600] sm:$0xff]
    %v301 = vld [vmem:[#allocation5 + $0x608] sm:$0xf]
    %v302 = vld [vmem:[#allocation5 + $0x60c] sm:$0xff]
    %v303 = vld [vmem:[#allocation5 + $0x614] sm:$0xff]
    %v304 = vld [vmem:[#allocation5 + $0x61c] sm:$0xff]
    %v305 = vld [vmem:[#allocation5 + $0x624] sm:$0xff]
    %v306 = vld [vmem:[#allocation5 + $0x62c] sm:$0xf]
    %v307 = vld [vmem:[#allocation5 + $0x630] sm:$0xff]
    %v308 = vld [vmem:[#allocation5 + $0x638] sm:$0xff]
    %v309 = vld [vmem:[#allocation5 + $0x640] sm:$0xff]
    %v310 = vld [vmem:[#allocation5 + $0x648] sm:$0xff]
    %v311 = vld [vmem:[#allocation5 + $0x650] sm:$0xf]
    %v312 = vld [vmem:[#allocation5 + $0x654] sm:$0xff]
    %v313 = vld [vmem:[#allocation5 + $0x65c] sm:$0xff]
    %v314 = vld [vmem:[#allocation5 + $0x664] sm:$0xff]
    %v315 = vld [vmem:[#allocation5 + $0x66c] sm:$0xff]
    %v316 = vld [vmem:[#allocation5 + $0x674] sm:$0xf]
    %v317 = vld [vmem:[#allocation5 + $0x678] sm:$0xff]
    %v318 = vld [vmem:[#allocation5 + $0x680] sm:$0xff]
    %v319 = vld [vmem:[#allocation5 + $0x688] sm:$0xff]
    %v320 = vld [vmem:[#allocation5 + $0x690] sm:$0xff]
    %v321 = vld [vmem:[#allocation5 + $0x698] sm:$0xf]
    %v322 = vld [vmem:[#allocation5 + $0x69c] sm:$0xff]
    %v323 = vld [vmem:[#allocation5 + $0x6a4] sm:$0xff]
    %v324 = vld [vmem:[#allocation5 + $0x6ac] sm:$0xff]
    %v325 = vld [vmem:[#allocation5 + $0x6b4] sm:$0xff]
    %v326 = vld [vmem:[#allocation5 + $0x6bc] sm:$0xf]
    %v327 = vld [vmem:[#allocation5 + $0x6c0] sm:$0xff]
    %v328 = vld [vmem:[#allocation5 + $0x6c8] sm:$0xff]
    %v329 = vld [vmem:[#allocation5 + $0x6d0] sm:$0xff]
    %v330 = vld [vmem:[#allocation5 + $0x6d8] sm:$0xff]
    %v331 = vld [vmem:[#allocation5 + $0x6e0] sm:$0xf]
    %v332 = vld [vmem:[#allocation5 + $0x6e4] sm:$0xff]
    %v333 = vld [vmem:[#allocation5 + $0x6ec] sm:$0xff]
    %v334 = vld [vmem:[#allocation5 + $0x6f4] sm:$0xff]
    %v335 = vld [vmem:[#allocation5 + $0x6fc] sm:$0xff]
    %v336 = vld [vmem:[#allocation5 + $0x704] sm:$0xf]
    %v337 = vld [vmem:[#allocation5 + $0x708] sm:$0xff]
    %v338 = vld [vmem:[#allocation5 + $0x710] sm:$0xff]
    %v339 = vld [vmem:[#allocation5 + $0x718] sm:$0xff]
    %v340 = vld [vmem:[#allocation5 + $0x720] sm:$0xff]
    %v341 = vld [vmem:[#allocation5 + $0x728] sm:$0xf]
    %v342 = vld [vmem:[#allocation5 + $0x72c] sm:$0xff]
    %v343 = vld [vmem:[#allocation5 + $0x734] sm:$0xff]
    %v344 = vld [vmem:[#allocation5 + $0x73c] sm:$0xff]
    %v345 = vld [vmem:[#allocation5 + $0x744] sm:$0xff]
    %v346 = vld [vmem:[#allocation5 + $0x74c] sm:$0xf]
    %v347 = vld [vmem:[#allocation5 + $0x750] sm:$0xff]
    %v348 = vld [vmem:[#allocation5 + $0x758] sm:$0xff]
    %v349 = vld [vmem:[#allocation5 + $0x760] sm:$0xff]
    %v350 = vld [vmem:[#allocation5 + $0x768] sm:$0xff]
    %v351 = vld [vmem:[#allocation5 + $0x770] sm:$0xf]
    %v352 = vld [vmem:[#allocation5 + $0x774] sm:$0xff]
    %v353 = vld [vmem:[#allocation5 + $0x77c] sm:$0xff]
    %v354 = vld [vmem:[#allocation5 + $0x784] sm:$0xff]
    %v355 = vld [vmem:[#allocation5 + $0x78c] sm:$0xff]
    %v356 = vld [vmem:[#allocation5 + $0x794] sm:$0xf]
    %v357 = vld [vmem:[#allocation5 + $0x798] sm:$0xff]
    %v358 = vld [vmem:[#allocation5 + $0x7a0] sm:$0xff]
    %v359 = vld [vmem:[#allocation5 + $0x7a8] sm:$0xff]
    %v360 = vld [vmem:[#allocation5 + $0x7b0] sm:$0xff]
    %v361 = vld [vmem:[#allocation5 + $0x7b8] sm:$0xf]
    %v362 = vld [vmem:[#allocation5 + $0x7bc] sm:$0xff]
    %v363 = vld [vmem:[#allocation5 + $0x7c4] sm:$0xff]
    %v364 = vld [vmem:[#allocation5 + $0x7cc] sm:$0xff]
    %v365 = vld [vmem:[#allocation5 + $0x7d4] sm:$0xff]
    %v366 = vld [vmem:[#allocation5 + $0x7dc] sm:$0xf]
    %v367 = vld [vmem:[#allocation5 + $0x7e0] sm:$0xff]
    %v368 = vld [vmem:[#allocation5 + $0x7e8] sm:$0xff]
    %v369 = vld [vmem:[#allocation5 + $0x7f0] sm:$0xff]
    %v370 = vld [vmem:[#allocation5 + $0x7f8] sm:$0xff]
    %v371 = vld [vmem:[#allocation5 + $0x800] sm:$0xf]
    %v372 = vld [vmem:[#allocation5 + $0x804] sm:$0xff]
    %v373 = vld [vmem:[#allocation5 + $0x80c] sm:$0xff]
    %v374 = vld [vmem:[#allocation5 + $0x814] sm:$0xff]
    %v375 = vld [vmem:[#allocation5 + $0x81c] sm:$0xff]
    %v376 = vld [vmem:[#allocation5 + $0x824] sm:$0xf]
    %v377 = vld [vmem:[#allocation5 + $0x828] sm:$0xff]
    %v378 = vld [vmem:[#allocation5 + $0x830] sm:$0xff]
    %v379 = vld [vmem:[#allocation5 + $0x838] sm:$0xff]
    %v380 = vld [vmem:[#allocation5 + $0x840] sm:$0xff]
    %v381 = vld [vmem:[#allocation5 + $0x848] sm:$0xf]
    %v382 = vld [vmem:[#allocation5 + $0x84c] sm:$0xff]
    %v383 = vld [vmem:[#allocation5 + $0x854] sm:$0xff]
    %v384 = vld [vmem:[#allocation5 + $0x85c] sm:$0xff]
    %v385 = vld [vmem:[#allocation5 + $0x864] sm:$0xff]
    %v386 = vld [vmem:[#allocation5 + $0x86c] sm:$0xf]
    %v387 = vld [vmem:[#allocation5 + $0x870] sm:$0xff]
    %v388 = vld [vmem:[#allocation5 + $0x878] sm:$0xff]
    %v389 = vld [vmem:[#allocation5 + $0x880] sm:$0xff]
    %v390 = vld [vmem:[#allocation5 + $0x888] sm:$0xff]
    %v391 = vld [vmem:[#allocation5 + $0x890] sm:$0xf]
    %v392 = vld [vmem:[#allocation5 + $0x894] sm:$0xff]
    %v393 = vld [vmem:[#allocation5 + $0x89c] sm:$0xff]
    %v394 = vld [vmem:[#allocation5 + $0x8a4] sm:$0xff]
    %v395 = vld [vmem:[#allocation5 + $0x8ac] sm:$0xff]
    %v396 = vld [vmem:[#allocation5 + $0x8b4] sm:$0xf]
    %v397 = vld [vmem:[#allocation5 + $0x8b8] sm:$0xff]
    %v398 = vld [vmem:[#allocation5 + $0x8c0] sm:$0xff]
    %v399 = vld [vmem:[#allocation5 + $0x8c8] sm:$0xff]
    %v400 = vld [vmem:[#allocation5 + $0x8d0] sm:$0xff]
    %v401 = vld [vmem:[#allocation5 + $0x8d8] sm:$0xf]
    %v402 = vld [vmem:[#allocation5 + $0x8dc] sm:$0xff]
    %v403 = vld [vmem:[#allocation5 + $0x8e4] sm:$0xff]
    %v404 = vld [vmem:[#allocation5 + $0x8ec] sm:$0xff]
    %v405 = vld [vmem:[#allocation5 + $0x8f4] sm:$0xff]
    %v406 = vld [vmem:[#allocation5 + $0x8fc] sm:$0xf]
    %v407 = vld [vmem:[#allocation7] sm:$0x3]
    %vm408 = vcmask 64512
    %v410 = vsel %vm408, %v407, 0
    %vm412 = vcmask 1043456
    %v414 = vsel %vm412, %v83, 0
    %v417 = vsel %vm412, %v84, 0
    %v420 = vsel %vm412, %v85, 0
    %v423 = vsel %vm412, %v86, 0
    %425 = vmatprep.subr.bf16.mxu0 %v417
    %426 = vmatpush1.bf16.msra.mxu0 %v414
    %427 = vmatprep.subr.bf16.mxu0 0
    %428 = vmatpush1.bf16.msra.mxu0 0
    %429 = vmatprep.subr.bf16.mxu0 0
    %430 = vmatpush1.bf16.msra.mxu0 0
    %431 = vmatprep.subr.bf16.mxu0 0
    %432 = vmatpush1.bf16.msra.mxu0 0
    %433 = vmatprep.subr.bf16.mxu0 0
    %434 = vmatpush1.bf16.msra.mxu0 0
    %435 = vmatprep.subr.bf16.mxu0 0
    %436 = vmatpush1.bf16.msra.mxu0 0
    %437 = vmatprep.subr.bf16.mxu0 0
    %438 = vmatpush1.bf16.msra.mxu0 0
    %439 = vmatprep.subr.bf16.mxu0 0
    %440 = vmatpush1.bf16.msra.mxu0 0
    %441 = vmatprep.subr.bf16.mxu0 0
    %442 = vmatpush1.bf16.msra.mxu0 0
    %443 = vmatprep.subr.bf16.mxu0 0
    %444 = vmatpush1.bf16.msra.mxu0 0
    %445 = vmatprep.subr.bf16.mxu0 0
    %446 = vmatpush1.bf16.msra.mxu0 0
    %447 = vmatprep.subr.bf16.mxu0 0
    %448 = vmatpush1.bf16.msra.mxu0 0
    %449 = vmatprep.subr.bf16.mxu0 0
    %450 = vmatpush1.bf16.msra.mxu0 0
    %451 = vmatprep.subr.bf16.mxu0 0
    %452 = vmatpush1.bf16.msra.mxu0 0
    %453 = vmatprep.subr.bf16.mxu0 0
    %454 = vmatpush1.bf16.msra.mxu0 0
    %455 = vmatprep.subr.bf16.mxu0 0
    %456 = vmatpush1.bf16.msra.mxu0 0
    %457 = vmatprep.mubr.bf16.mxu0 0
    %458 = vmatmul.mubr.bf16.gmra.mrb[0].mxu0 %v410
    %v459 = vpop.f32.mrb[0].mxu0
    %v460 = vadd.f32 0.0, %v459
    %v461 = vpop.f32.mrb[0].mxu0
    %v462 = vadd.f32 0.0, %v461
    %v463 = vpop.f32.mrb[0].mxu0
    %v464 = vpop.f32.mrb[0].mxu0
    %465 = vdwg.mxu0
    %466 = vmatprep.subr.bf16.mxu0 %v423
    %467 = vmatpush1.bf16.msra.mxu0 %v420
    %468 = vmatprep.subr.bf16.mxu0 0
    %469 = vmatpush1.bf16.msra.mxu0 0
    %470 = vmatprep.subr.bf16.mxu0 0
    %471 = vmatpush1.bf16.msra.mxu0 0
    %472 = vmatprep.subr.bf16.mxu0 0
    %473 = vmatpush1.bf16.msra.mxu0 0
    %474 = vmatprep.subr.bf16.mxu0 0
    %475 = vmatpush1.bf16.msra.mxu0 0
    %476 = vmatprep.subr.bf16.mxu0 0
    %477 = vmatpush1.bf16.msra.mxu0 0
    %478 = vmatprep.subr.bf16.mxu0 0
    %479 = vmatpush1.bf16.msra.mxu0 0
    %480 = vmatprep.subr.bf16.mxu0 0
    %481 = vmatpush1.bf16.msra.mxu0 0
    %482 = vmatprep.subr.bf16.mxu0 0
    %483 = vmatpush1.bf16.msra.mxu0 0
    %484 = vmatprep.subr.bf16.mxu0 0
    %485 = vmatpush1.bf16.msra.mxu0 0
    %486 = vmatprep.subr.bf16.mxu0 0
    %487 = vmatpush1.bf16.msra.mxu0 0
    %488 = vmatprep.subr.bf16.mxu0 0
    %489 = vmatpush1.bf16.msra.mxu0 0
    %490 = vmatprep.subr.bf16.mxu0 0
    %491 = vmatpush1.bf16.msra.mxu0 0
    %492 = vmatprep.subr.bf16.mxu0 0
    %493 = vmatpush1.bf16.msra.mxu0 0
    %494 = vmatprep.subr.bf16.mxu0 0
    %495 = vmatpush1.bf16.msra.mxu0 0
    %496 = vmatprep.subr.bf16.mxu0 0
    %497 = vmatpush1.bf16.msra.mxu0 0
    %498 = vmatprep.mubr.bf16.mxu0 0
    %499 = vmatmul.mubr.bf16.gmra.mrb[0].mxu0 %v410
    %v500 = vpop.f32.mrb[0].mxu0
    %v501 = vadd.f32 0.0, %v500
    %v502 = vpop.f32.mrb[0].mxu0
    %v503 = vadd.f32 0.0, %v502
    %v504 = vpop.f32.mrb[0].mxu0
    %v505 = vpop.f32.mrb[0].mxu0
    %506 = vdwg.mxu0
    %v507 = vsel %vm412, %v460, 0.0
    %v508 = vsel %vm412, %v462, 0.0
    %v509 = vadd.f32 %v507, %v508
    %v510 = vsel %vm412, %v501, 0.0
    %v511 = vadd.f32 %v509, %v510
    %v512 = vsel %vm412, %v503, 0.0
    %v513 = vadd.f32 %v511, %v512
    %514 = vadd.xlane.f32.xlu0 %v513
    %v515 = vpop.xlane.xlu0 %514
    %v516 = vrcp.pop 512.0
    %v517 = vmul.f32 %v515, %v516
    %v518 = vsub.f32 %v460, %v517
    %v519 = vsub.f32 %v462, %v517
    %v520 = vsub.f32 %v501, %v517
    %v521 = vsub.f32 %v503, %v517
    %v522 = vmul.f32 %v518, %v518
    %v523 = vmul.f32 %v519, %v519
    %v524 = vmul.f32 %v520, %v520
    %v525 = vmul.f32 %v521, %v521
    %v526 = vsel %vm412, %v522, 0.0
    %v527 = vsel %vm412, %v523, 0.0
    %v528 = vadd.f32 %v526, %v527
    %v529 = vsel %vm412, %v524, 0.0
    %v530 = vadd.f32 %v528, %v529
    %v531 = vsel %vm412, %v525, 0.0
    %v532 = vadd.f32 %v530, %v531
    %533 = vadd.xlane.f32.xlu0 %v532
    %v534 = vpop.xlane.xlu0 %533
    %v535 = vmul.f32 %v534, %v516
    %v536 = vadd.f32 %v535, 1e-05
    %v537 = vrsqrt.pop %v536
    %v538 = vmul.f32 %v518, %v537
    %v539 = vmul.f32 %v519, %v537
    %v540 = vmul.f32 %v520, %v537
    %v541 = vmul.f32 %v521, %v537
    %543 = vset.pattern.permute.xlu0 0
    %544 = vperm.xlu0 %543, %v74
    %v545 = vpop.permute.xlu0 %544
    %v547 = vmul.f32 %v538, %v545
    %v548 = vmul.f32 %v539, %v545
    %v549 = vmul.f32 %v540, %v545
    %v550 = vmul.f32 %v541, %v545
    %551 = vset.pattern.permute.xlu0 1
    %552 = vperm.xlu0 %551, %v74
    %v553 = vpop.permute.xlu0 %552
    %v555 = vadd.f32 %v547, %v553
    %v556 = vadd.f32 %v548, %v553
    %v557 = vadd.f32 %v549, %v553
    %v558 = vadd.f32 %v550, %v553
    %v559 = vmax.f32 %v555, 0.0
    %v560 = vmax.f32 %v556, 0.0
    %v561 = vmax.f32 %v557, 0.0
    %v562 = vmax.f32 %v558, 0.0
    %v563 = vpack.c.bf16 %v559, %v559
    %v564 = vpack.c.bf16 %v560, %v560
    %v565 = vpack.c.bf16 %v561, %v561
    %v566 = vpack.c.bf16 %v562, %v562
    %v887 = vunpack.c.l.b16 %v87
    %v888 = vunpack.c.h.b16 %v87
    %v889 = vunpack.c.l.b16 %v88
    %v890 = vunpack.c.h.b16 %v88
    %v891 = vunpack.c.l.b16 %v89
    %v892 = vunpack.c.h.b16 %v89
    %v893 = vunpack.c.l.b16 %v90
    %v894 = vunpack.c.h.b16 %v90
    %v895 = vunpack.c.l.b16 %v91
    %v896 = vunpack.c.l.b16 %v92
    %v897 = vunpack.c.h.b16 %v92
    %v898 = vunpack.c.l.b16 %v93
    %v899 = vunpack.c.h.b16 %v93
    %v900 = vunpack.c.l.b16 %v94
    %v901 = vunpack.c.h.b16 %v94
    %v902 = vunpack.c.l.b16 %v95
    %v903 = vunpack.c.h.b16 %v95
    %v904 = vunpack.c.l.b16 %v96
    %v905 = vunpack.c.l.b16 %v97
    %v906 = vunpack.c.h.b16 %v97
    %v907 = vunpack.c.l.b16 %v98
    %v908 = vunpack.c.h.b16 %v98
    %v909 = vunpack.c.l.b16 %v99
    %v910 = vunpack.c.h.b16 %v99
    %v911 = vunpack.c.l.b16 %v100
    %v912 = vunpack.c.h.b16 %v100
    %v913 = vunpack.c.l.b16 %v101
    %v914 = vunpack.c.l.b16 %v102
    %v915 = vunpack.c.h.b16 %v102
    %v916 = vunpack.c.l.b16 %v103
    %v917 = vunpack.c.h.b16 %v103
    %v918 = vunpack.c.l.b16 %v104
    %v919 = vunpack.c.h.b16 %v104
    %v920 = vunpack.c.l.b16 %v105
    %v921 = vunpack.c.h.b16 %v105
    %v922 = vunpack.c.l.b16 %v106
    %v923 = vunpack.c.l.b16 %v107
    %v924 = vunpack.c.h.b16 %v107
    %v925 = vunpack.c.l.b16 %v108
    %v926 = vunpack.c.h.b16 %v108
    %v927 = vunpack.c.l.b16 %v109
    %v928 = vunpack.c.h.b16 %v109
    %v929 = vunpack.c.l.b16 %v110
    %v930 = vunpack.c.h.b16 %v110
    %v931 = vunpack.c.l.b16 %v111
    %v932 = vunpack.c.l.b16 %v112
    %v933 = vunpack.c.h.b16 %v112
    %v934 = vunpack.c.l.b16 %v113
    %v935 = vunpack.c.h.b16 %v113
    %v936 = vunpack.c.l.b16 %v114
    %v937 = vunpack.c.h.b16 %v114
    %v938 = vunpack.c.l.b16 %v115
    %v939 = vunpack.c.h.b16 %v115
    %v940 = vunpack.c.l.b16 %v116
    %v941 = vunpack.c.l.b16 %v117
    %v942 = vunpack.c.h.b16 %v117
    %v943 = vunpack.c.l.b16 %v118
    %v944 = vunpack.c.h.b16 %v118
    %v945 = vunpack.c.l.b16 %v119
    %v946 = vunpack.c.h.b16 %v119
    %v947 = vunpack.c.l.b16 %v120
    %v948 = vunpack.c.h.b16 %v120
    %v949 = vunpack.c.l.b16 %v121
    %v950 = vunpack.c.l.b16 %v122
    %v951 = vunpack.c.h.b16 %v122
    %v952 = vunpack.c.l.b16 %v123
    %v953 = vunpack.c.h.b16 %v123
    %v954 = vunpack.c.l.b16 %v124
    %v955 = vunpack.c.h.b16 %v124
    %v956 = vunpack.c.l.b16 %v125
    %v957 = vunpack.c.h.b16 %v125
    %v958 = vunpack.c.l.b16 %v126
    %v959 = vunpack.c.l.b16 %v127
    %v960 = vunpack.c.h.b16 %v127
    %v961 = vunpack.c.l.b16 %v128
    %v962 = vunpack.c.h.b16 %v128
    %v963 = vunpack.c.l.b16 %v129
    %v964 = vunpack.c.h.b16 %v129
    %v965 = vunpack.c.l.b16 %v130
    %v966 = vunpack.c.h.b16 %v130
    %v967 = vunpack.c.l.b16 %v131
    %v968 = vunpack.c.l.b16 %v132
    %v969 = vunpack.c.h.b16 %v132
    %v970 = vunpack.c.l.b16 %v133
    %v971 = vunpack.c.h.b16 %v133
    %v972 = vunpack.c.l.b16 %v134
    %v973 = vunpack.c.h.b16 %v134
    %v974 = vunpack.c.l.b16 %v135
    %v975 = vunpack.c.h.b16 %v135
    %v976 = vunpack.c.l.b16 %v136
    %v977 = vunpack.c.l.b16 %v137
    %v978 = vunpack.c.h.b16 %v137
    %v979 = vunpack.c.l.b16 %v138
    %v980 = vunpack.c.h.b16 %v138
    %v981 = vunpack.c.l.b16 %v139
    %v982 = vunpack.c.h.b16 %v139
    %v983 = vunpack.c.l.b16 %v140
    %v984 = vunpack.c.h.b16 %v140
    %v985 = vunpack.c.l.b16 %v141
    %v986 = vunpack.c.l.b16 %v142
    %v987 = vunpack.c.h.b16 %v142
    %v988 = vunpack.c.l.b16 %v143
    %v989 = vunpack.c.h.b16 %v143
    %v990 = vunpack.c.l.b16 %v144
    %v991 = vunpack.c.h.b16 %v144
    %v992 = vunpack.c.l.b16 %v145
    %v993 = vunpack.c.h.b16 %v145
    %v994 = vunpack.c.l.b16 %v146
    %v995 = vunpack.c.l.b16 %v147
    %v996 = vunpack.c.h.b16 %v147
    %v997 = vunpack.c.l.b16 %v148
    %v998 = vunpack.c.h.b16 %v148
    %v999 = vunpack.c.l.b16 %v149
    %v1000 = vunpack.c.h.b16 %v149
    %v1001 = vunpack.c.l.b16 %v150
    %v1002 = vunpack.c.h.b16 %v150
    %v1003 = vunpack.c.l.b16 %v151
    %v1004 = vunpack.c.l.b16 %v152
    %v1005 = vunpack.c.h.b16 %v152
    %v1006 = vunpack.c.l.b16 %v153
    %v1007 = vunpack.c.h.b16 %v153
    %v1008 = vunpack.c.l.b16 %v154
    %v1009 = vunpack.c.h.b16 %v154
    %v1010 = vunpack.c.l.b16 %v155
    %v1011 = vunpack.c.h.b16 %v155
    %v1012 = vunpack.c.l.b16 %v156
    %v1013 = vunpack.c.l.b16 %v157
    %v1014 = vunpack.c.h.b16 %v157
    %v1015 = vunpack.c.l.b16 %v158
    %v1016 = vunpack.c.h.b16 %v158
    %v1017 = vunpack.c.l.b16 %v159
    %v1018 = vunpack.c.h.b16 %v159
    %v1019 = vunpack.c.l.b16 %v160
    %v1020 = vunpack.c.h.b16 %v160
    %v1021 = vunpack.c.l.b16 %v161
    %v1022 = vunpack.c.l.b16 %v162
    %v1023 = vunpack.c.h.b16 %v162
    %v1024 = vunpack.c.l.b16 %v163
    %v1025 = vunpack.c.h.b16 %v163
    %v1026 = vunpack.c.l.b16 %v164
    %v1027 = vunpack.c.h.b16 %v164
    %v1028 = vunpack.c.l.b16 %v165
    %v1029 = vunpack.c.h.b16 %v165
    %v1030 = vunpack.c.l.b16 %v166
    %v1031 = vunpack.c.l.b16 %v167
    %v1032 = vunpack.c.h.b16 %v167
    %v1033 = vunpack.c.l.b16 %v168
    %v1034 = vunpack.c.h.b16 %v168
    %v1035 = vunpack.c.l.b16 %v169
    %v1036 = vunpack.c.h.b16 %v169
    %v1037 = vunpack.c.l.b16 %v170
    %v1038 = vunpack.c.h.b16 %v170
    %v1039 = vunpack.c.l.b16 %v171
    %v1040 = vunpack.c.l.b16 %v172
    %v1041 = vunpack.c.h.b16 %v172
    %v1042 = vunpack.c.l.b16 %v173
    %v1043 = vunpack.c.h.b16 %v173
    %v1044 = vunpack.c.l.b16 %v174
    %v1045 = vunpack.c.h.b16 %v174
    %v1046 = vunpack.c.l.b16 %v175
    %v1047 = vunpack.c.h.b16 %v175
    %v1048 = vunpack.c.l.b16 %v176
    %v1049 = vunpack.c.l.b16 %v177
    %v1050 = vunpack.c.h.b16 %v177
    %v1051 = vunpack.c.l.b16 %v178
    %v1052 = vunpack.c.h.b16 %v178
    %v1053 = vunpack.c.l.b16 %v179
    %v1054 = vunpack.c.h.b16 %v179
    %v1055 = vunpack.c.l.b16 %v180
    %v1056 = vunpack.c.h.b16 %v180
    %v1057 = vunpack.c.l.b16 %v181
    %v1058 = vunpack.c.l.b16 %v182
    %v1059 = vunpack.c.h.b16 %v182
    %v1060 = vunpack.c.l.b16 %v183
    %v1061 = vunpack.c.h.b16 %v183
    %v1062 = vunpack.c.l.b16 %v184
    %v1063 = vunpack.c.h.b16 %v184
    %v1064 = vunpack.c.l.b16 %v185
    %v1065 = vunpack.c.h.b16 %v185
    %v1066 = vunpack.c.l.b16 %v186
    %v1067 = vunpack.c.l.b16 %v187
    %v1068 = vunpack.c.h.b16 %v187
    %v1069 = vunpack.c.l.b16 %v188
    %v1070 = vunpack.c.h.b16 %v188
    %v1071 = vunpack.c.l.b16 %v189
    %v1072 = vunpack.c.h.b16 %v189
    %v1073 = vunpack.c.l.b16 %v190
    %v1074 = vunpack.c.h.b16 %v190
    %v1075 = vunpack.c.l.b16 %v191
    %v1076 = vunpack.c.l.b16 %v192
    %v1077 = vunpack.c.h.b16 %v192
    %v1078 = vunpack.c.l.b16 %v193
    %v1079 = vunpack.c.h.b16 %v193
    %v1080 = vunpack.c.l.b16 %v194
    %v1081 = vunpack.c.h.b16 %v194
    %v1082 = vunpack.c.l.b16 %v195
    %v1083 = vunpack.c.h.b16 %v195
    %v1084 = vunpack.c.l.b16 %v196
    %v1085 = vunpack.c.l.b16 %v197
    %v1086 = vunpack.c.h.b16 %v197
    %v1087 = vunpack.c.l.b16 %v198
    %v1088 = vunpack.c.h.b16 %v198
    %v1089 = vunpack.c.l.b16 %v199
    %v1090 = vunpack.c.h.b16 %v199
    %v1091 = vunpack.c.l.b16 %v200
    %v1092 = vunpack.c.h.b16 %v200
    %v1093 = vunpack.c.l.b16 %v201
    %v1094 = vunpack.c.l.b16 %v202
    %v1095 = vunpack.c.h.b16 %v202
    %v1096 = vunpack.c.l.b16 %v203
    %v1097 = vunpack.c.h.b16 %v203
    %v1098 = vunpack.c.l.b16 %v204
    %v1099 = vunpack.c.h.b16 %v204
    %v1100 = vunpack.c.l.b16 %v205
    %v1101 = vunpack.c.h.b16 %v205
    %v1102 = vunpack.c.l.b16 %v206
    %v1103 = vunpack.c.l.b16 %v207
    %v1104 = vunpack.c.h.b16 %v207
    %v1105 = vunpack.c.l.b16 %v208
    %v1106 = vunpack.c.h.b16 %v208
    %v1107 = vunpack.c.l.b16 %v209
    %v1108 = vunpack.c.h.b16 %v209
    %v1109 = vunpack.c.l.b16 %v210
    %v1110 = vunpack.c.h.b16 %v210
    %v1111 = vunpack.c.l.b16 %v211
    %v1112 = vunpack.c.l.b16 %v212
    %v1113 = vunpack.c.h.b16 %v212
    %v1114 = vunpack.c.l.b16 %v213
    %v1115 = vunpack.c.h.b16 %v213
    %v1116 = vunpack.c.l.b16 %v214
    %v1117 = vunpack.c.h.b16 %v214
    %v1118 = vunpack.c.l.b16 %v215
    %v1119 = vunpack.c.h.b16 %v215
    %v1120 = vunpack.c.l.b16 %v216
    %v1121 = vunpack.c.l.b16 %v217
    %v1122 = vunpack.c.h.b16 %v217
    %v1123 = vunpack.c.l.b16 %v218
    %v1124 = vunpack.c.h.b16 %v218
    %v1125 = vunpack.c.l.b16 %v219
    %v1126 = vunpack.c.h.b16 %v219
    %v1127 = vunpack.c.l.b16 %v220
    %v1128 = vunpack.c.h.b16 %v220
    %v1129 = vunpack.c.l.b16 %v221
    %v1130 = vunpack.c.l.b16 %v222
    %v1131 = vunpack.c.h.b16 %v222
    %v1132 = vunpack.c.l.b16 %v223
    %v1133 = vunpack.c.h.b16 %v223
    %v1134 = vunpack.c.l.b16 %v224
    %v1135 = vunpack.c.h.b16 %v224
    %v1136 = vunpack.c.l.b16 %v225
    %v1137 = vunpack.c.h.b16 %v225
    %v1138 = vunpack.c.l.b16 %v226
    %v1139 = vunpack.c.l.b16 %v227
    %v1140 = vunpack.c.h.b16 %v227
    %v1141 = vunpack.c.l.b16 %v228
    %v1142 = vunpack.c.h.b16 %v228
    %v1143 = vunpack.c.l.b16 %v229
    %v1144 = vunpack.c.h.b16 %v229
    %v1145 = vunpack.c.l.b16 %v230
    %v1146 = vunpack.c.h.b16 %v230
    %v1147 = vunpack.c.l.b16 %v231
    %v1148 = vunpack.c.l.b16 %v232
    %v1149 = vunpack.c.h.b16 %v232
    %v1150 = vunpack.c.l.b16 %v233
    %v1151 = vunpack.c.h.b16 %v233
    %v1152 = vunpack.c.l.b16 %v234
    %v1153 = vunpack.c.h.b16 %v234
    %v1154 = vunpack.c.l.b16 %v235
    %v1155 = vunpack.c.h.b16 %v235
    %v1156 = vunpack.c.l.b16 %v236
    %v1157 = vunpack.c.l.b16 %v237
    %v1158 = vunpack.c.h.b16 %v237
    %v1159 = vunpack.c.l.b16 %v238
    %v1160 = vunpack.c.h.b16 %v238
    %v1161 = vunpack.c.l.b16 %v239
    %v1162 = vunpack.c.h.b16 %v239
    %v1163 = vunpack.c.l.b16 %v240
    %v1164 = vunpack.c.h.b16 %v240
    %v1165 = vunpack.c.l.b16 %v241
    %v1166 = vunpack.c.l.b16 %v242
    %v1167 = vunpack.c.h.b16 %v242
    %v1168 = vunpack.c.l.b16 %v243
    %v1169 = vunpack.c.h.b16 %v243
    %v1170 = vunpack.c.l.b16 %v244
    %v1171 = vunpack.c.h.b16 %v244
    %v1172 = vunpack.c.l.b16 %v245
    %v1173 = vunpack.c.h.b16 %v245
    %v1174 = vunpack.c.l.b16 %v246
    %v1175 = vunpack.c.l.b16 %v247
    %v1176 = vunpack.c.h.b16 %v247
    %v1177 = vunpack.c.l.b16 %v248
    %v1178 = vunpack.c.h.b16 %v248
    %v1179 = vunpack.c.l.b16 %v249
    %v1180 = vunpack.c.h.b16 %v249
    %v1181 = vunpack.c.l.b16 %v250
    %v1182 = vunpack.c.h.b16 %v250
    %v1183 = vunpack.c.l.b16 %v251
    %v1184 = vunpack.c.l.b16 %v252
    %v1185 = vunpack.c.h.b16 %v252
    %v1186 = vunpack.c.l.b16 %v253
    %v1187 = vunpack.c.h.b16 %v253
    %v1188 = vunpack.c.l.b16 %v254
    %v1189 = vunpack.c.h.b16 %v254
    %v1190 = vunpack.c.l.b16 %v255
    %v1191 = vunpack.c.h.b16 %v255
    %v1192 = vunpack.c.l.b16 %v256
    %v1193 = vunpack.c.l.b16 %v257
    %v1194 = vunpack.c.h.b16 %v257
    %v1195 = vunpack.c.l.b16 %v258
    %v1196 = vunpack.c.h.b16 %v258
    %v1197 = vunpack.c.l.b16 %v259
    %v1198 = vunpack.c.h.b16 %v259
    %v1199 = vunpack.c.l.b16 %v260
    %v1200 = vunpack.c.h.b16 %v260
    %v1201 = vunpack.c.l.b16 %v261
    %v1202 = vunpack.c.l.b16 %v262
    %v1203 = vunpack.c.h.b16 %v262
    %v1204 = vunpack.c.l.b16 %v263
    %v1205 = vunpack.c.h.b16 %v263
    %v1206 = vunpack.c.l.b16 %v264
    %v1207 = vunpack.c.h.b16 %v264
    %v1208 = vunpack.c.l.b16 %v265
    %v1209 = vunpack.c.h.b16 %v265
    %v1210 = vunpack.c.l.b16 %v266
    %v1211 = vunpack.c.l.b16 %v267
    %v1212 = vunpack.c.h.b16 %v267
    %v1213 = vunpack.c.l.b16 %v268
    %v1214 = vunpack.c.h.b16 %v268
    %v1215 = vunpack.c.l.b16 %v269
    %v1216 = vunpack.c.h.b16 %v269
    %v1217 = vunpack.c.l.b16 %v270
    %v1218 = vunpack.c.h.b16 %v270
    %v1219 = vunpack.c.l.b16 %v271
    %v1220 = vunpack.c.l.b16 %v272
    %v1221 = vunpack.c.h.b16 %v272
    %v1222 = vunpack.c.l.b16 %v273
    %v1223 = vunpack.c.h.b16 %v273
    %v1224 = vunpack.c.l.b16 %v274
    %v1225 = vunpack.c.h.b16 %v274
    %v1226 = vunpack.c.l.b16 %v275
    %v1227 = vunpack.c.h.b16 %v275
    %v1228 = vunpack.c.l.b16 %v276
    %v1229 = vunpack.c.l.b16 %v277
    %v1230 = vunpack.c.h.b16 %v277
    %v1231 = vunpack.c.l.b16 %v278
    %v1232 = vunpack.c.h.b16 %v278
    %v1233 = vunpack.c.l.b16 %v279
    %v1234 = vunpack.c.h.b16 %v279
    %v1235 = vunpack.c.l.b16 %v280
    %v1236 = vunpack.c.h.b16 %v280
    %v1237 = vunpack.c.l.b16 %v281
    %v1238 = vunpack.c.l.b16 %v282
    %v1239 = vunpack.c.h.b16 %v282
    %v1240 = vunpack.c.l.b16 %v283
    %v1241 = vunpack.c.h.b16 %v283
    %v1242 = vunpack.c.l.b16 %v284
    %v1243 = vunpack.c.h.b16 %v284
    %v1244 = vunpack.c.l.b16 %v285
    %v1245 = vunpack.c.h.b16 %v285
    %v1246 = vunpack.c.l.b16 %v286
    %v1247 = vunpack.c.l.b16 %v287
    %v1248 = vunpack.c.h.b16 %v287
    %v1249 = vunpack.c.l.b16 %v288
    %v1250 = vunpack.c.h.b16 %v288
    %v1251 = vunpack.c.l.b16 %v289
    %v1252 = vunpack.c.h.b16 %v289
    %v1253 = vunpack.c.l.b16 %v290
    %v1254 = vunpack.c.h.b16 %v290
    %v1255 = vunpack.c.l.b16 %v291
    %v1256 = vunpack.c.l.b16 %v292
    %v1257 = vunpack.c.h.b16 %v292
    %v1258 = vunpack.c.l.b16 %v293
    %v1259 = vunpack.c.h.b16 %v293
    %v1260 = vunpack.c.l.b16 %v294
    %v1261 = vunpack.c.h.b16 %v294
    %v1262 = vunpack.c.l.b16 %v295
    %v1263 = vunpack.c.h.b16 %v295
    %v1264 = vunpack.c.l.b16 %v296
    %v1265 = vunpack.c.l.b16 %v297
    %v1266 = vunpack.c.h.b16 %v297
    %v1267 = vunpack.c.l.b16 %v298
    %v1268 = vunpack.c.h.b16 %v298
    %v1269 = vunpack.c.l.b16 %v299
    %v1270 = vunpack.c.h.b16 %v299
    %v1271 = vunpack.c.l.b16 %v300
    %v1272 = vunpack.c.h.b16 %v300
    %v1273 = vunpack.c.l.b16 %v301
    %v1274 = vunpack.c.l.b16 %v302
    %v1275 = vunpack.c.h.b16 %v302
    %v1276 = vunpack.c.l.b16 %v303
    %v1277 = vunpack.c.h.b16 %v303
    %v1278 = vunpack.c.l.b16 %v304
    %v1279 = vunpack.c.h.b16 %v304
    %v1280 = vunpack.c.l.b16 %v305
    %v1281 = vunpack.c.h.b16 %v305
    %v1282 = vunpack.c.l.b16 %v306
    %v1283 = vunpack.c.l.b16 %v307
    %v1284 = vunpack.c.h.b16 %v307
    %v1285 = vunpack.c.l.b16 %v308
    %v1286 = vunpack.c.h.b16 %v308
    %v1287 = vunpack.c.l.b16 %v309
    %v1288 = vunpack.c.h.b16 %v309
    %v1289 = vunpack.c.l.b16 %v310
    %v1290 = vunpack.c.h.b16 %v310
    %v1291 = vunpack.c.l.b16 %v311
    %v1292 = vunpack.c.l.b16 %v312
    %v1293 = vunpack.c.h.b16 %v312
    %v1294 = vunpack.c.l.b16 %v313
    %v1295 = vunpack.c.h.b16 %v313
    %v1296 = vunpack.c.l.b16 %v314
    %v1297 = vunpack.c.h.b16 %v314
    %v1298 = vunpack.c.l.b16 %v315
    %v1299 = vunpack.c.h.b16 %v315
    %v1300 = vunpack.c.l.b16 %v316
    %v1301 = vunpack.c.l.b16 %v317
    %v1302 = vunpack.c.h.b16 %v317
    %v1303 = vunpack.c.l.b16 %v318
    %v1304 = vunpack.c.h.b16 %v318
    %v1305 = vunpack.c.l.b16 %v319
    %v1306 = vunpack.c.h.b16 %v319
    %v1307 = vunpack.c.l.b16 %v320
    %v1308 = vunpack.c.h.b16 %v320
    %v1309 = vunpack.c.l.b16 %v321
    %v1310 = vunpack.c.l.b16 %v322
    %v1311 = vunpack.c.h.b16 %v322
    %v1312 = vunpack.c.l.b16 %v323
    %v1313 = vunpack.c.h.b16 %v323
    %v1314 = vunpack.c.l.b16 %v324
    %v1315 = vunpack.c.h.b16 %v324
    %v1316 = vunpack.c.l.b16 %v325
    %v1317 = vunpack.c.h.b16 %v325
    %v1318 = vunpack.c.l.b16 %v326
    %v1319 = vunpack.c.l.b16 %v327
    %v1320 = vunpack.c.h.b16 %v327
    %v1321 = vunpack.c.l.b16 %v328
    %v1322 = vunpack.c.h.b16 %v328
    %v1323 = vunpack.c.l.b16 %v329
    %v1324 = vunpack.c.h.b16 %v329
    %v1325 = vunpack.c.l.b16 %v330
    %v1326 = vunpack.c.h.b16 %v330
    %v1327 = vunpack.c.l.b16 %v331
    %v1328 = vunpack.c.l.b16 %v332
    %v1329 = vunpack.c.h.b16 %v332
    %v1330 = vunpack.c.l.b16 %v333
    %v1331 = vunpack.c.h.b16 %v333
    %v1332 = vunpack.c.l.b16 %v334
    %v1333 = vunpack.c.h.b16 %v334
    %v1334 = vunpack.c.l.b16 %v335
    %v1335 = vunpack.c.h.b16 %v335
    %v1336 = vunpack.c.l.b16 %v336
    %v1337 = vunpack.c.l.b16 %v337
    %v1338 = vunpack.c.h.b16 %v337
    %v1339 = vunpack.c.l.b16 %v338
    %v1340 = vunpack.c.h.b16 %v338
    %v1341 = vunpack.c.l.b16 %v339
    %v1342 = vunpack.c.h.b16 %v339
    %v1343 = vunpack.c.l.b16 %v340
    %v1344 = vunpack.c.h.b16 %v340
    %v1345 = vunpack.c.l.b16 %v341
    %v1346 = vunpack.c.l.b16 %v342
    %v1347 = vunpack.c.h.b16 %v342
    %v1348 = vunpack.c.l.b16 %v343
    %v1349 = vunpack.c.h.b16 %v343
    %v1350 = vunpack.c.l.b16 %v344
    %v1351 = vunpack.c.h.b16 %v344
    %v1352 = vunpack.c.l.b16 %v345
    %v1353 = vunpack.c.h.b16 %v345
    %v1354 = vunpack.c.l.b16 %v346
    %v1355 = vunpack.c.l.b16 %v347
    %v1356 = vunpack.c.h.b16 %v347
    %v1357 = vunpack.c.l.b16 %v348
    %v1358 = vunpack.c.h.b16 %v348
    %v1359 = vunpack.c.l.b16 %v349
    %v1360 = vunpack.c.h.b16 %v349
    %v1361 = vunpack.c.l.b16 %v350
    %v1362 = vunpack.c.h.b16 %v350
    %v1363 = vunpack.c.l.b16 %v351
    %v1364 = vunpack.c.l.b16 %v352
    %v1365 = vunpack.c.h.b16 %v352
    %v1366 = vunpack.c.l.b16 %v353
    %v1367 = vunpack.c.h.b16 %v353
    %v1368 = vunpack.c.l.b16 %v354
    %v1369 = vunpack.c.h.b16 %v354
    %v1370 = vunpack.c.l.b16 %v355
    %v1371 = vunpack.c.h.b16 %v355
    %v1372 = vunpack.c.l.b16 %v356
    %v1373 = vunpack.c.l.b16 %v357
    %v1374 = vunpack.c.h.b16 %v357
    %v1375 = vunpack.c.l.b16 %v358
    %v1376 = vunpack.c.h.b16 %v358
    %v1377 = vunpack.c.l.b16 %v359
    %v1378 = vunpack.c.h.b16 %v359
    %v1379 = vunpack.c.l.b16 %v360
    %v1380 = vunpack.c.h.b16 %v360
    %v1381 = vunpack.c.l.b16 %v361
    %v1382 = vunpack.c.l.b16 %v362
    %v1383 = vunpack.c.h.b16 %v362
    %v1384 = vunpack.c.l.b16 %v363
    %v1385 = vunpack.c.h.b16 %v363
    %v1386 = vunpack.c.l.b16 %v364
    %v1387 = vunpack.c.h.b16 %v364
    %v1388 = vunpack.c.l.b16 %v365
    %v1389 = vunpack.c.h.b16 %v365
    %v1390 = vunpack.c.l.b16 %v366
    %v1391 = vunpack.c.l.b16 %v367
    %v1392 = vunpack.c.h.b16 %v367
    %v1393 = vunpack.c.l.b16 %v368
    %v1394 = vunpack.c.h.b16 %v368
    %v1395 = vunpack.c.l.b16 %v369
    %v1396 = vunpack.c.h.b16 %v369
    %v1397 = vunpack.c.l.b16 %v370
    %v1398 = vunpack.c.h.b16 %v370
    %v1399 = vunpack.c.l.b16 %v371
    %v1400 = vunpack.c.l.b16 %v372
    %v1401 = vunpack.c.h.b16 %v372
    %v1402 = vunpack.c.l.b16 %v373
    %v1403 = vunpack.c.h.b16 %v373
    %v1404 = vunpack.c.l.b16 %v374
    %v1405 = vunpack.c.h.b16 %v374
    %v1406 = vunpack.c.l.b16 %v375
    %v1407 = vunpack.c.h.b16 %v375
    %v1408 = vunpack.c.l.b16 %v376
    %v1409 = vunpack.c.l.b16 %v377
    %v1410 = vunpack.c.h.b16 %v377
    %v1411 = vunpack.c.l.b16 %v378
    %v1412 = vunpack.c.h.b16 %v378
    %v1413 = vunpack.c.l.b16 %v379
    %v1414 = vunpack.c.h.b16 %v379
    %v1415 = vunpack.c.l.b16 %v380
    %v1416 = vunpack.c.h.b16 %v380
    %v1417 = vunpack.c.l.b16 %v381
    %v1418 = vunpack.c.l.b16 %v382
    %v1419 = vunpack.c.h.b16 %v382
    %v1420 = vunpack.c.l.b16 %v383
    %v1421 = vunpack.c.h.b16 %v383
    %v1422 = vunpack.c.l.b16 %v384
    %v1423 = vunpack.c.h.b16 %v384
    %v1424 = vunpack.c.l.b16 %v385
    %v1425 = vunpack.c.h.b16 %v385
    %v1426 = vunpack.c.l.b16 %v386
    %v1427 = vunpack.c.l.b16 %v387
    %v1428 = vunpack.c.h.b16 %v387
    %v1429 = vunpack.c.l.b16 %v388
    %v1430 = vunpack.c.h.b16 %v388
    %v1431 = vunpack.c.l.b16 %v389
    %v1432 = vunpack.c.h.b16 %v389
    %v1433 = vunpack.c.l.b16 %v390
    %v1434 = vunpack.c.h.b16 %v390
    %v1435 = vunpack.c.l.b16 %v391
    %v1436 = vunpack.c.l.b16 %v392
    %v1437 = vunpack.c.h.b16 %v392
    %v1438 = vunpack.c.l.b16 %v393
    %v1439 = vunpack.c.h.b16 %v393
    %v1440 = vunpack.c.l.b16 %v394
    %v1441 = vunpack.c.h.b16 %v394
    %v1442 = vunpack.c.l.b16 %v395
    %v1443 = vunpack.c.h.b16 %v395
    %v1444 = vunpack.c.l.b16 %v396
    %v1445 = vunpack.c.l.b16 %v397
    %v1446 = vunpack.c.h.b16 %v397
    %v1447 = vunpack.c.l.b16 %v398
    %v1448 = vunpack.c.h.b16 %v398
    %v1449 = vunpack.c.l.b16 %v399
    %v1450 = vunpack.c.h.b16 %v399
    %v1451 = vunpack.c.l.b16 %v400
    %v1452 = vunpack.c.h.b16 %v400
    %v1453 = vunpack.c.l.b16 %v401
    %v1454 = vunpack.c.l.b16 %v402
    %v1455 = vunpack.c.h.b16 %v402
    %v1456 = vunpack.c.l.b16 %v403
    %v1457 = vunpack.c.h.b16 %v403
    %v1458 = vunpack.c.l.b16 %v404
    %v1459 = vunpack.c.h.b16 %v404
    %v1460 = vunpack.c.l.b16 %v405
    %v1461 = vunpack.c.h.b16 %v405
    %v1462 = vunpack.c.l.b16 %v406
    %v1463 = vpack.c.b16 %v896, %v887
    %v1464 = vpack.c.b16 %v897, %v888
    %v1465 = vpack.c.b16 %v898, %v889
    %v1466 = vpack.c.b16 %v899, %v890
    %v1467 = vpack.c.b16 %v900, %v891
    %v1468 = vpack.c.b16 %v901, %v892
    %v1469 = vpack.c.b16 %v902, %v893
    %v1470 = vpack.c.b16 %v903, %v894
    %v1471 = vpack.c.b16 %v904, %v895
    %v1472 = vpack.c.b16 %v914, %v905
    %v1473 = vpack.c.b16 %v915, %v906
    %v1474 = vpack.c.b16 %v916, %v907
    %v1475 = vpack.c.b16 %v917, %v908
    %v1476 = vpack.c.b16 %v918, %v909
    %v1477 = vpack.c.b16 %v919, %v910
    %v1478 = vpack.c.b16 %v920, %v911
    %v1479 = vpack.c.b16 %v921, %v912
    %v1480 = vpack.c.b16 %v922, %v913
    %v1481 = vpack.c.b16 %v932, %v923
    %v1482 = vpack.c.b16 %v933, %v924
    %v1483 = vpack.c.b16 %v934, %v925
    %v1484 = vpack.c.b16 %v935, %v926
    %v1485 = vpack.c.b16 %v936, %v927
    %v1486 = vpack.c.b16 %v937, %v928
    %v1487 = vpack.c.b16 %v938, %v929
    %v1488 = vpack.c.b16 %v939, %v930
    %v1489 = vpack.c.b16 %v940, %v931
    %v1490 = vpack.c.b16 %v950, %v941
    %v1491 = vpack.c.b16 %v951, %v942
    %v1492 = vpack.c.b16 %v952, %v943
    %v1493 = vpack.c.b16 %v953, %v944
    %v1494 = vpack.c.b16 %v954, %v945
    %v1495 = vpack.c.b16 %v955, %v946
    %v1496 = vpack.c.b16 %v956, %v947
    %v1497 = vpack.c.b16 %v957, %v948
    %v1498 = vpack.c.b16 %v958, %v949
    %v1499 = vpack.c.b16 %v968, %v959
    %v1500 = vpack.c.b16 %v969, %v960
    %v1501 = vpack.c.b16 %v970, %v961
    %v1502 = vpack.c.b16 %v971, %v962
    %v1503 = vpack.c.b16 %v972, %v963
    %v1504 = vpack.c.b16 %v973, %v964
    %v1505 = vpack.c.b16 %v974, %v965
    %v1506 = vpack.c.b16 %v975, %v966
    %v1507 = vpack.c.b16 %v976, %v967
    %v1508 = vpack.c.b16 %v986, %v977
    %v1509 = vpack.c.b16 %v987, %v978
    %v1510 = vpack.c.b16 %v988, %v979
    %v1511 = vpack.c.b16 %v989, %v980
    %v1512 = vpack.c.b16 %v990, %v981
    %v1513 = vpack.c.b16 %v991, %v982
    %v1514 = vpack.c.b16 %v992, %v983
    %v1515 = vpack.c.b16 %v993, %v984
    %v1516 = vpack.c.b16 %v994, %v985
    %v1517 = vpack.c.b16 %v1004, %v995
    %v1518 = vpack.c.b16 %v1005, %v996
    %v1519 = vpack.c.b16 %v1006, %v997
    %v1520 = vpack.c.b16 %v1007, %v998
    %v1521 = vpack.c.b16 %v1008, %v999
    %v1522 = vpack.c.b16 %v1009, %v1000
    %v1523 = vpack.c.b16 %v1010, %v1001
    %v1524 = vpack.c.b16 %v1011, %v1002
    %v1525 = vpack.c.b16 %v1012, %v1003
    %v1526 = vpack.c.b16 %v1022, %v1013
    %v1527 = vpack.c.b16 %v1023, %v1014
    %v1528 = vpack.c.b16 %v1024, %v1015
    %v1529 = vpack.c.b16 %v1025, %v1016
    %v1530 = vpack.c.b16 %v1026, %v1017
    %v1531 = vpack.c.b16 %v1027, %v1018
    %v1532 = vpack.c.b16 %v1028, %v1019
    %v1533 = vpack.c.b16 %v1029, %v1020
    %v1534 = vpack.c.b16 %v1030, %v1021
    %v1535 = vpack.c.b16 %v1040, %v1031
    %v1536 = vpack.c.b16 %v1041, %v1032
    %v1537 = vpack.c.b16 %v1042, %v1033
    %v1538 = vpack.c.b16 %v1043, %v1034
    %v1539 = vpack.c.b16 %v1044, %v1035
    %v1540 = vpack.c.b16 %v1045, %v1036
    %v1541 = vpack.c.b16 %v1046, %v1037
    %v1542 = vpack.c.b16 %v1047, %v1038
    %v1543 = vpack.c.b16 %v1048, %v1039
    %v1544 = vpack.c.b16 %v1058, %v1049
    %v1545 = vpack.c.b16 %v1059, %v1050
    %v1546 = vpack.c.b16 %v1060, %v1051
    %v1547 = vpack.c.b16 %v1061, %v1052
    %v1548 = vpack.c.b16 %v1062, %v1053
    %v1549 = vpack.c.b16 %v1063, %v1054
    %v1550 = vpack.c.b16 %v1064, %v1055
    %v1551 = vpack.c.b16 %v1065, %v1056
    %v1552 = vpack.c.b16 %v1066, %v1057
    %v1553 = vpack.c.b16 %v1076, %v1067
    %v1554 = vpack.c.b16 %v1077, %v1068
    %v1555 = vpack.c.b16 %v1078, %v1069
    %v1556 = vpack.c.b16 %v1079, %v1070
    %v1557 = vpack.c.b16 %v1080, %v1071
    %v1558 = vpack.c.b16 %v1081, %v1072
    %v1559 = vpack.c.b16 %v1082, %v1073
    %v1560 = vpack.c.b16 %v1083, %v1074
    %v1561 = vpack.c.b16 %v1084, %v1075
    %v1562 = vpack.c.b16 %v1094, %v1085
    %v1563 = vpack.c.b16 %v1095, %v1086
    %v1564 = vpack.c.b16 %v1096, %v1087
    %v1565 = vpack.c.b16 %v1097, %v1088
    %v1566 = vpack.c.b16 %v1098, %v1089
    %v1567 = vpack.c.b16 %v1099, %v1090
    %v1568 = vpack.c.b16 %v1100, %v1091
    %v1569 = vpack.c.b16 %v1101, %v1092
    %v1570 = vpack.c.b16 %v1102, %v1093
    %v1571 = vpack.c.b16 %v1112, %v1103
    %v1572 = vpack.c.b16 %v1113, %v1104
    %v1573 = vpack.c.b16 %v1114, %v1105
    %v1574 = vpack.c.b16 %v1115, %v1106
    %v1575 = vpack.c.b16 %v1116, %v1107
    %v1576 = vpack.c.b16 %v1117, %v1108
    %v1577 = vpack.c.b16 %v1118, %v1109
    %v1578 = vpack.c.b16 %v1119, %v1110
    %v1579 = vpack.c.b16 %v1120, %v1111
    %v1580 = vpack.c.b16 %v1130, %v1121
    %v1581 = vpack.c.b16 %v1131, %v1122
    %v1582 = vpack.c.b16 %v1132, %v1123
    %v1583 = vpack.c.b16 %v1133, %v1124
    %v1584 = vpack.c.b16 %v1134, %v1125
    %v1585 = vpack.c.b16 %v1135, %v1126
    %v1586 = vpack.c.b16 %v1136, %v1127
    %v1587 = vpack.c.b16 %v1137, %v1128
    %v1588 = vpack.c.b16 %v1138, %v1129
    %v1589 = vpack.c.b16 %v1148, %v1139
    %v1590 = vpack.c.b16 %v1149, %v1140
    %v1591 = vpack.c.b16 %v1150, %v1141
    %v1592 = vpack.c.b16 %v1151, %v1142
    %v1593 = vpack.c.b16 %v1152, %v1143
    %v1594 = vpack.c.b16 %v1153, %v1144
    %v1595 = vpack.c.b16 %v1154, %v1145
    %v1596 = vpack.c.b16 %v1155, %v1146
    %v1597 = vpack.c.b16 %v1156, %v1147
    %v1598 = vpack.c.b16 %v1166, %v1157
    %v1599 = vpack.c.b16 %v1167, %v1158
    %v1600 = vpack.c.b16 %v1168, %v1159
    %v1601 = vpack.c.b16 %v1169, %v1160
    %v1602 = vpack.c.b16 %v1170, %v1161
    %v1603 = vpack.c.b16 %v1171, %v1162
    %v1604 = vpack.c.b16 %v1172, %v1163
    %v1605 = vpack.c.b16 %v1173, %v1164
    %v1606 = vpack.c.b16 %v1174, %v1165
    %v1607 = vpack.c.b16 %v1184, %v1175
    %v1608 = vpack.c.b16 %v1185, %v1176
    %v1609 = vpack.c.b16 %v1186, %v1177
    %v1610 = vpack.c.b16 %v1187, %v1178
    %v1611 = vpack.c.b16 %v1188, %v1179
    %v1612 = vpack.c.b16 %v1189, %v1180
    %v1613 = vpack.c.b16 %v1190, %v1181
    %v1614 = vpack.c.b16 %v1191, %v1182
    %v1615 = vpack.c.b16 %v1192, %v1183
    %v1616 = vpack.c.b16 %v1202, %v1193
    %v1617 = vpack.c.b16 %v1203, %v1194
    %v1618 = vpack.c.b16 %v1204, %v1195
    %v1619 = vpack.c.b16 %v1205, %v1196
    %v1620 = vpack.c.b16 %v1206, %v1197
    %v1621 = vpack.c.b16 %v1207, %v1198
    %v1622 = vpack.c.b16 %v1208, %v1199
    %v1623 = vpack.c.b16 %v1209, %v1200
    %v1624 = vpack.c.b16 %v1210, %v1201
    %v1625 = vpack.c.b16 %v1220, %v1211
    %v1626 = vpack.c.b16 %v1221, %v1212
    %v1627 = vpack.c.b16 %v1222, %v1213
    %v1628 = vpack.c.b16 %v1223, %v1214
    %v1629 = vpack.c.b16 %v1224, %v1215
    %v1630 = vpack.c.b16 %v1225, %v1216
    %v1631 = vpack.c.b16 %v1226, %v1217
    %v1632 = vpack.c.b16 %v1227, %v1218
    %v1633 = vpack.c.b16 %v1228, %v1219
    %v1634 = vpack.c.b16 %v1238, %v1229
    %v1635 = vpack.c.b16 %v1239, %v1230
    %v1636 = vpack.c.b16 %v1240, %v1231
    %v1637 = vpack.c.b16 %v1241, %v1232
    %v1638 = vpack.c.b16 %v1242, %v1233
    %v1639 = vpack.c.b16 %v1243, %v1234
    %v1640 = vpack.c.b16 %v1244, %v1235
    %v1641 = vpack.c.b16 %v1245, %v1236
    %v1642 = vpack.c.b16 %v1246, %v1237
    %v1643 = vpack.c.b16 %v1256, %v1247
    %v1644 = vpack.c.b16 %v1257, %v1248
    %v1645 = vpack.c.b16 %v1258, %v1249
    %v1646 = vpack.c.b16 %v1259, %v1250
    %v1647 = vpack.c.b16 %v1260, %v1251
    %v1648 = vpack.c.b16 %v1261, %v1252
    %v1649 = vpack.c.b16 %v1262, %v1253
    %v1650 = vpack.c.b16 %v1263, %v1254
    %v1651 = vpack.c.b16 %v1264, %v1255
    %v1652 = vpack.c.b16 %v1274, %v1265
    %v1653 = vpack.c.b16 %v1275, %v1266
    %v1654 = vpack.c.b16 %v1276, %v1267
    %v1655 = vpack.c.b16 %v1277, %v1268
    %v1656 = vpack.c.b16 %v1278, %v1269
    %v1657 = vpack.c.b16 %v1279, %v1270
    %v1658 = vpack.c.b16 %v1280, %v1271
    %v1659 = vpack.c.b16 %v1281, %v1272
    %v1660 = vpack.c.b16 %v1282, %v1273
    %v1661 = vpack.c.b16 %v1292, %v1283
    %v1662 = vpack.c.b16 %v1293, %v1284
    %v1663 = vpack.c.b16 %v1294, %v1285
    %v1664 = vpack.c.b16 %v1295, %v1286
    %v1665 = vpack.c.b16 %v1296, %v1287
    %v1666 = vpack.c.b16 %v1297, %v1288
    %v1667 = vpack.c.b16 %v1298, %v1289
    %v1668 = vpack.c.b16 %v1299, %v1290
    %v1669 = vpack.c.b16 %v1300, %v1291
    %v1670 = vpack.c.b16 %v1310, %v1301
    %v1671 = vpack.c.b16 %v1311, %v1302
    %v1672 = vpack.c.b16 %v1312, %v1303
    %v1673 = vpack.c.b16 %v1313, %v1304
    %v1674 = vpack.c.b16 %v1314, %v1305
    %v1675 = vpack.c.b16 %v1315, %v1306
    %v1676 = vpack.c.b16 %v1316, %v1307
    %v1677 = vpack.c.b16 %v1317, %v1308
    %v1678 = vpack.c.b16 %v1318, %v1309
    %v1679 = vpack.c.b16 %v1328, %v1319
    %v1680 = vpack.c.b16 %v1329, %v1320
    %v1681 = vpack.c.b16 %v1330, %v1321
    %v1682 = vpack.c.b16 %v1331, %v1322
    %v1683 = vpack.c.b16 %v1332, %v1323
    %v1684 = vpack.c.b16 %v1333, %v1324
    %v1685 = vpack.c.b16 %v1334, %v1325
    %v1686 = vpack.c.b16 %v1335, %v1326
    %v1687 = vpack.c.b16 %v1336, %v1327
    %v1688 = vpack.c.b16 %v1346, %v1337
    %v1689 = vpack.c.b16 %v1347, %v1338
    %v1690 = vpack.c.b16 %v1348, %v1339
    %v1691 = vpack.c.b16 %v1349, %v1340
    %v1692 = vpack.c.b16 %v1350, %v1341
    %v1693 = vpack.c.b16 %v1351, %v1342
    %v1694 = vpack.c.b16 %v1352, %v1343
    %v1695 = vpack.c.b16 %v1353, %v1344
    %v1696 = vpack.c.b16 %v1354, %v1345
    %v1697 = vpack.c.b16 %v1364, %v1355
    %v1698 = vpack.c.b16 %v1365, %v1356
    %v1699 = vpack.c.b16 %v1366, %v1357
    %v1700 = vpack.c.b16 %v1367, %v1358
    %v1701 = vpack.c.b16 %v1368, %v1359
    %v1702 = vpack.c.b16 %v1369, %v1360
    %v1703 = vpack.c.b16 %v1370, %v1361
    %v1704 = vpack.c.b16 %v1371, %v1362
    %v1705 = vpack.c.b16 %v1372, %v1363
    %v1706 = vpack.c.b16 %v1382, %v1373
    %v1707 = vpack.c.b16 %v1383, %v1374
    %v1708 = vpack.c.b16 %v1384, %v1375
    %v1709 = vpack.c.b16 %v1385, %v1376
    %v1710 = vpack.c.b16 %v1386, %v1377
    %v1711 = vpack.c.b16 %v1387, %v1378
    %v1712 = vpack.c.b16 %v1388, %v1379
    %v1713 = vpack.c.b16 %v1389, %v1380
    %v1714 = vpack.c.b16 %v1390, %v1381
    %v1715 = vpack.c.b16 %v1400, %v1391
    %v1716 = vpack.c.b16 %v1401, %v1392
    %v1717 = vpack.c.b16 %v1402, %v1393
    %v1718 = vpack.c.b16 %v1403, %v1394
    %v1719 = vpack.c.b16 %v1404, %v1395
    %v1720 = vpack.c.b16 %v1405, %v1396
    %v1721 = vpack.c.b16 %v1406, %v1397
    %v1722 = vpack.c.b16 %v1407, %v1398
    %v1723 = vpack.c.b16 %v1408, %v1399
    %v1724 = vpack.c.b16 %v1418, %v1409
    %v1725 = vpack.c.b16 %v1419, %v1410
    %v1726 = vpack.c.b16 %v1420, %v1411
    %v1727 = vpack.c.b16 %v1421, %v1412
    %v1728 = vpack.c.b16 %v1422, %v1413
    %v1729 = vpack.c.b16 %v1423, %v1414
    %v1730 = vpack.c.b16 %v1424, %v1415
    %v1731 = vpack.c.b16 %v1425, %v1416
    %v1732 = vpack.c.b16 %v1426, %v1417
    %v1733 = vpack.c.b16 %v1436, %v1427
    %v1734 = vpack.c.b16 %v1437, %v1428
    %v1735 = vpack.c.b16 %v1438, %v1429
    %v1736 = vpack.c.b16 %v1439, %v1430
    %v1737 = vpack.c.b16 %v1440, %v1431
    %v1738 = vpack.c.b16 %v1441, %v1432
    %v1739 = vpack.c.b16 %v1442, %v1433
    %v1740 = vpack.c.b16 %v1443, %v1434
    %v1741 = vpack.c.b16 %v1444, %v1435
    %v1742 = vpack.c.b16 %v1454, %v1445
    %v1743 = vpack.c.b16 %v1455, %v1446
    %v1744 = vpack.c.b16 %v1456, %v1447
    %v1745 = vpack.c.b16 %v1457, %v1448
    %v1746 = vpack.c.b16 %v1458, %v1449
    %v1747 = vpack.c.b16 %v1459, %v1450
    %v1748 = vpack.c.b16 %v1460, %v1451
    %v1749 = vpack.c.b16 %v1461, %v1452
    %v1750 = vpack.c.b16 %v1462, %v1453
    %2039 = vmatprep.subr.bf16.mxu0 %v1464
    %2040 = vmatpush1.bf16.msra.mxu0 %v1463
    %2041 = vmatprep.subr.bf16.mxu0 %v1473
    %2042 = vmatpush1.bf16.msra.mxu0 %v1472
    %2043 = vmatprep.subr.bf16.mxu0 %v1482
    %2044 = vmatpush1.bf16.msra.mxu0 %v1481
    %2045 = vmatprep.subr.bf16.mxu0 %v1491
    %2046 = vmatpush1.bf16.msra.mxu0 %v1490
    %2047 = vmatprep.subr.bf16.mxu0 %v1500
    %2048 = vmatpush1.bf16.msra.mxu0 %v1499
    %2049 = vmatprep.subr.bf16.mxu0 %v1509
    %2050 = vmatpush1.bf16.msra.mxu0 %v1508
    %2051 = vmatprep.subr.bf16.mxu0 %v1518
    %2052 = vmatpush1.bf16.msra.mxu0 %v1517
    %2053 = vmatprep.subr.bf16.mxu0 %v1527
    %2054 = vmatpush1.bf16.msra.mxu0 %v1526
    %2055 = vmatprep.subr.bf16.mxu0 %v1536
    %2056 = vmatpush1.bf16.msra.mxu0 %v1535
    %2057 = vmatprep.subr.bf16.mxu0 %v1545
    %2058 = vmatpush1.bf16.msra.mxu0 %v1544
    %2059 = vmatprep.subr.bf16.mxu0 %v1554
    %2060 = vmatpush1.bf16.msra.mxu0 %v1553
    %2061 = vmatprep.subr.bf16.mxu0 %v1563
    %2062 = vmatpush1.bf16.msra.mxu0 %v1562
    %2063 = vmatprep.subr.bf16.mxu0 %v1572
    %2064 = vmatpush1.bf16.msra.mxu0 %v1571
    %2065 = vmatprep.subr.bf16.mxu0 %v1581
    %2066 = vmatpush1.bf16.msra.mxu0 %v1580
    %2067 = vmatprep.subr.bf16.mxu0 %v1590
    %2068 = vmatpush1.bf16.msra.mxu0 %v1589
    %2069 = vmatprep.subr.bf16.mxu0 %v1599
    %2070 = vmatpush1.bf16.msra.mxu0 %v1598
    %2071 = vmatprep.mubr.bf16.mxu0 %v564
    %2072 = vmatmul.mubr.bf16.gmra.mrb[0].mxu0 %v563
    %v2073 = vpop.f32.mrb[0].mxu0
    %v2074 = vadd.f32 0.0, %v2073
    %v2075 = vpop.f32.mrb[0].mxu0
    %v2076 = vadd.f32 0.0, %v2075
    %v2077 = vpop.f32.mrb[0].mxu0
    %v2078 = vpop.f32.mrb[0].mxu0
    %2079 = vdwg.mxu0
    %2080 = vmatprep.subr.bf16.mxu0 %v1608
    %2081 = vmatpush1.bf16.msra.mxu0 %v1607
    %2082 = vmatprep.subr.bf16.mxu0 %v1617
    %2083 = vmatpush1.bf16.msra.mxu0 %v1616
    %2084 = vmatprep.subr.bf16.mxu0 %v1626
    %2085 = vmatpush1.bf16.msra.mxu0 %v1625
    %2086 = vmatprep.subr.bf16.mxu0 %v1635
    %2087 = vmatpush1.bf16.msra.mxu0 %v1634
    %2088 = vmatprep.subr.bf16.mxu0 %v1644
    %2089 = vmatpush1.bf16.msra.mxu0 %v1643
    %2090 = vmatprep.subr.bf16.mxu0 %v1653
    %2091 = vmatpush1.bf16.msra.mxu0 %v1652
    %2092 = vmatprep.subr.bf16.mxu0 %v1662
    %2093 = vmatpush1.bf16.msra.mxu0 %v1661
    %2094 = vmatprep.subr.bf16.mxu0 %v1671
    %2095 = vmatpush1.bf16.msra.mxu0 %v1670
    %2096 = vmatprep.subr.bf16.mxu0 %v1680
    %2097 = vmatpush1.bf16.msra.mxu0 %v1679
    %2098 = vmatprep.subr.bf16.mxu0 %v1689
    %2099 = vmatpush1.bf16.msra.mxu0 %v1688
    %2100 = vmatprep.subr.bf16.mxu0 %v1698
    %2101 = vmatpush1.bf16.msra.mxu0 %v1697
    %2102 = vmatprep.subr.bf16.mxu0 %v1707
    %2103 = vmatpush1.bf16.msra.mxu0 %v1706
    %2104 = vmatprep.subr.bf16.mxu0 %v1716
    %2105 = vmatpush1.bf16.msra.mxu0 %v1715
    %2106 = vmatprep.subr.bf16.mxu0 %v1725
    %2107 = vmatpush1.bf16.msra.mxu0 %v1724
    %2108 = vmatprep.subr.bf16.mxu0 %v1734
    %2109 = vmatpush1.bf16.msra.mxu0 %v1733
    %2110 = vmatprep.subr.bf16.mxu0 %v1743
    %2111 = vmatpush1.bf16.msra.mxu0 %v1742
    %2112 = vmatprep.mubr.bf16.mxu0 %v566
    %2113 = vmatmul.mubr.bf16.gmra.mrb[0].mxu0 %v565
    %v2114 = vpop.f32.mrb[0].mxu0
    %v2115 = vadd.f32 %v2074, %v2114
    %v2116 = vpop.f32.mrb[0].mxu0
    %v2117 = vadd.f32 %v2076, %v2116
    %v2118 = vpop.f32.mrb[0].mxu0
    %v2119 = vpop.f32.mrb[0].mxu0
    %2120 = vdwg.mxu0
    %2121 = vmatprep.subr.bf16.mxu0 %v1466
    %2122 = vmatpush1.bf16.msra.mxu0 %v1465
    %2123 = vmatprep.subr.bf16.mxu0 %v1475
    %2124 = vmatpush1.bf16.msra.mxu0 %v1474
    %2125 = vmatprep.subr.bf16.mxu0 %v1484
    %2126 = vmatpush1.bf16.msra.mxu0 %v1483
    %2127 = vmatprep.subr.bf16.mxu0 %v1493
    %2128 = vmatpush1.bf16.msra.mxu0 %v1492
    %2129 = vmatprep.subr.bf16.mxu0 %v1502
    %2130 = vmatpush1.bf16.msra.mxu0 %v1501
    %2131 = vmatprep.subr.bf16.mxu0 %v1511
    %2132 = vmatpush1.bf16.msra.mxu0 %v1510
    %2133 = vmatprep.subr.bf16.mxu0 %v1520
    %2134 = vmatpush1.bf16.msra.mxu0 %v1519
    %2135 = vmatprep.subr.bf16.mxu0 %v1529
    %2136 = vmatpush1.bf16.msra.mxu0 %v1528
    %2137 = vmatprep.subr.bf16.mxu0 %v1538
    %2138 = vmatpush1.bf16.msra.mxu0 %v1537
    %2139 = vmatprep.subr.bf16.mxu0 %v1547
    %2140 = vmatpush1.bf16.msra.mxu0 %v1546
    %2141 = vmatprep.subr.bf16.mxu0 %v1556
    %2142 = vmatpush1.bf16.msra.mxu0 %v1555
    %2143 = vmatprep.subr.bf16.mxu0 %v1565
    %2144 = vmatpush1.bf16.msra.mxu0 %v1564
    %2145 = vmatprep.subr.bf16.mxu0 %v1574
    %2146 = vmatpush1.bf16.msra.mxu0 %v1573
    %2147 = vmatprep.subr.bf16.mxu0 %v1583
    %2148 = vmatpush1.bf16.msra.mxu0 %v1582
    %2149 = vmatprep.subr.bf16.mxu0 %v1592
    %2150 = vmatpush1.bf16.msra.mxu0 %v1591
    %2151 = vmatprep.subr.bf16.mxu0 %v1601
    %2152 = vmatpush1.bf16.msra.mxu0 %v1600
    %2153 = vmatprep.mubr.bf16.mxu0 %v564
    %2154 = vmatmul.mubr.bf16.gmra.mrb[0].mxu0 %v563
    %v2155 = vpop.f32.mrb[0].mxu0
    %v2156 = vadd.f32 0.0, %v2155
    %v2157 = vpop.f32.mrb[0].mxu0
    %v2158 = vadd.f32 0.0, %v2157
    %v2159 = vpop.f32.mrb[0].mxu0
    %v2160 = vpop.f32.mrb[0].mxu0
    %2161 = vdwg.mxu0
    %2162 = vmatprep.subr.bf16.mxu0 %v1610
    %2163 = vmatpush1.bf16.msra.mxu0 %v1609
    %2164 = vmatprep.subr.bf16.mxu0 %v1619
    %2165 = vmatpush1.bf16.msra.mxu0 %v1618
    %2166 = vmatprep.subr.bf16.mxu0 %v1628
    %2167 = vmatpush1.bf16.msra.mxu0 %v1627
    %2168 = vmatprep.subr.bf16.mxu0 %v1637
    %2169 = vmatpush1.bf16.msra.mxu0 %v1636
    %2170 = vmatprep.subr.bf16.mxu0 %v1646
    %2171 = vmatpush1.bf16.msra.mxu0 %v1645
    %2172 = vmatprep.subr.bf16.mxu0 %v1655
    %2173 = vmatpush1.bf16.msra.mxu0 %v1654
    %2174 = vmatprep.subr.bf16.mxu0 %v1664
    %2175 = vmatpush1.bf16.msra.mxu0 %v1663
    %2176 = vmatprep.subr.bf16.mxu0 %v1673
    %2177 = vmatpush1.bf16.msra.mxu0 %v1672
    %2178 = vmatprep.subr.bf16.mxu0 %v1682
    %2179 = vmatpush1.bf16.msra.mxu0 %v1681
    %2180 = vmatprep.subr.bf16.mxu0 %v1691
    %2181 = vmatpush1.bf16.msra.mxu0 %v1690
    %2182 = vmatprep.subr.bf16.mxu0 %v1700
    %2183 = vmatpush1.bf16.msra.mxu0 %v1699
    %2184 = vmatprep.subr.bf16.mxu0 %v1709
    %2185 = vmatpush1.bf16.msra.mxu0 %v1708
    %2186 = vmatprep.subr.bf16.mxu0 %v1718
    %2187 = vmatpush1.bf16.msra.mxu0 %v1717
    %2188 = vmatprep.subr.bf16.mxu0 %v1727
    %2189 = vmatpush1.bf16.msra.mxu0 %v1726
    %2190 = vmatprep.subr.bf16.mxu0 %v1736
    %2191 = vmatpush1.bf16.msra.mxu0 %v1735
    %2192 = vmatprep.subr.bf16.mxu0 %v1745
    %2193 = vmatpush1.bf16.msra.mxu0 %v1744
    %2194 = vmatprep.mubr.bf16.mxu0 %v566
    %2195 = vmatmul.mubr.bf16.gmra.mrb[0].mxu0 %v565
    %v2196 = vpop.f32.mrb[0].mxu0
    %v2197 = vadd.f32 %v2156, %v2196
    %v2198 = vpop.f32.mrb[0].mxu0
    %v2199 = vadd.f32 %v2158, %v2198
    %v2200 = vpop.f32.mrb[0].mxu0
    %v2201 = vpop.f32.mrb[0].mxu0
    %2202 = vdwg.mxu0
    %2203 = vmatprep.subr.bf16.mxu0 %v1468
    %2204 = vmatpush1.bf16.msra.mxu0 %v1467
    %2205 = vmatprep.subr.bf16.mxu0 %v1477
    %2206 = vmatpush1.bf16.msra.mxu0 %v1476
    %2207 = vmatprep.subr.bf16.mxu0 %v1486
    %2208 = vmatpush1.bf16.msra.mxu0 %v1485
    %2209 = vmatprep.subr.bf16.mxu0 %v1495
    %2210 = vmatpush1.bf16.msra.mxu0 %v1494
    %2211 = vmatprep.subr.bf16.mxu0 %v1504
    %2212 = vmatpush1.bf16.msra.mxu0 %v1503
    %2213 = vmatprep.subr.bf16.mxu0 %v1513
    %2214 = vmatpush1.bf16.msra.mxu0 %v1512
    %2215 = vmatprep.subr.bf16.mxu0 %v1522
    %2216 = vmatpush1.bf16.msra.mxu0 %v1521
    %2217 = vmatprep.subr.bf16.mxu0 %v1531
    %2218 = vmatpush1.bf16.msra.mxu0 %v1530
    %2219 = vmatprep.subr.bf16.mxu0 %v1540
    %2220 = vmatpush1.bf16.msra.mxu0 %v1539
    %2221 = vmatprep.subr.bf16.mxu0 %v1549
    %2222 = vmatpush1.bf16.msra.mxu0 %v1548
    %2223 = vmatprep.subr.bf16.mxu0 %v1558
    %2224 = vmatpush1.bf16.msra.mxu0 %v1557
    %2225 = vmatprep.subr.bf16.mxu0 %v1567
    %2226 = vmatpush1.bf16.msra.mxu0 %v1566
    %2227 = vmatprep.subr.bf16.mxu0 %v1576
    %2228 = vmatpush1.bf16.msra.mxu0 %v1575
    %2229 = vmatprep.subr.bf16.mxu0 %v1585
    %2230 = vmatpush1.bf16.msra.mxu0 %v1584
    %2231 = vmatprep.subr.bf16.mxu0 %v1594
    %2232 = vmatpush1.bf16.msra.mxu0 %v1593
    %2233 = vmatprep.subr.bf16.mxu0 %v1603
    %2234 = vmatpush1.bf16.msra.mxu0 %v1602
    %2235 = vmatprep.mubr.bf16.mxu0 %v564
    %2236 = vmatmul.mubr.bf16.gmra.mrb[0].mxu0 %v563
    %v2237 = vpop.f32.mrb[0].mxu0
    %v2238 = vadd.f32 0.0, %v2237
    %v2239 = vpop.f32.mrb[0].mxu0
    %v2240 = vadd.f32 0.0, %v2239
    %v2241 = vpop.f32.mrb[0].mxu0
    %v2242 = vpop.f32.mrb[0].mxu0
    %2243 = vdwg.mxu0
    %2244 = vmatprep.subr.bf16.mxu0 %v1612
    %2245 = vmatpush1.bf16.msra.mxu0 %v1611
    %2246 = vmatprep.subr.bf16.mxu0 %v1621
    %2247 = vmatpush1.bf16.msra.mxu0 %v1620
    %2248 = vmatprep.subr.bf16.mxu0 %v1630
    %2249 = vmatpush1.bf16.msra.mxu0 %v1629
    %2250 = vmatprep.subr.bf16.mxu0 %v1639
    %2251 = vmatpush1.bf16.msra.mxu0 %v1638
    %2252 = vmatprep.subr.bf16.mxu0 %v1648
    %2253 = vmatpush1.bf16.msra.mxu0 %v1647
    %2254 = vmatprep.subr.bf16.mxu0 %v1657
    %2255 = vmatpush1.bf16.msra.mxu0 %v1656
    %2256 = vmatprep.subr.bf16.mxu0 %v1666
    %2257 = vmatpush1.bf16.msra.mxu0 %v1665
    %2258 = vmatprep.subr.bf16.mxu0 %v1675
    %2259 = vmatpush1.bf16.msra.mxu0 %v1674
    %2260 = vmatprep.subr.bf16.mxu0 %v1684
    %2261 = vmatpush1.bf16.msra.mxu0 %v1683
    %2262 = vmatprep.subr.bf16.mxu0 %v1693
    %2263 = vmatpush1.bf16.msra.mxu0 %v1692
    %2264 = vmatprep.subr.bf16.mxu0 %v1702
    %2265 = vmatpush1.bf16.msra.mxu0 %v1701
    %2266 = vmatprep.subr.bf16.mxu0 %v1711
    %2267 = vmatpush1.bf16.msra.mxu0 %v1710
    %2268 = vmatprep.subr.bf16.mxu0 %v1720
    %2269 = vmatpush1.bf16.msra.mxu0 %v1719
    %2270 = vmatprep.subr.bf16.mxu0 %v1729
    %2271 = vmatpush1.bf16.msra.mxu0 %v1728
    %2272 = vmatprep.subr.bf16.mxu0 %v1738
    %2273 = vmatpush1.bf16.msra.mxu0 %v1737
    %2274 = vmatprep.subr.bf16.mxu0 %v1747
    %2275 = vmatpush1.bf16.msra.mxu0 %v1746
    %2276 = vmatprep.mubr.bf16.mxu0 %v566
    %2277 = vmatmul.mubr.bf16.gmra.mrb[0].mxu0 %v565
    %v2278 = vpop.f32.mrb[0].mxu0
    %v2279 = vadd.f32 %v2238, %v2278
    %v2280 = vpop.f32.mrb[0].mxu0
    %v2281 = vadd.f32 %v2240, %v2280
    %v2282 = vpop.f32.mrb[0].mxu0
    %v2283 = vpop.f32.mrb[0].mxu0
    %2284 = vdwg.mxu0
    %2285 = vmatprep.subr.bf16.mxu0 %v1470
    %2286 = vmatpush1.bf16.msra.mxu0 %v1469
    %2287 = vmatprep.subr.bf16.mxu0 %v1479
    %2288 = vmatpush1.bf16.msra.mxu0 %v1478
    %2289 = vmatprep.subr.bf16.mxu0 %v1488
    %2290 = vmatpush1.bf16.msra.mxu0 %v1487
    %2291 = vmatprep.subr.bf16.mxu0 %v1497
    %2292 = vmatpush1.bf16.msra.mxu0 %v1496
    %2293 = vmatprep.subr.bf16.mxu0 %v1506
    %2294 = vmatpush1.bf16.msra.mxu0 %v1505
    %2295 = vmatprep.subr.bf16.mxu0 %v1515
    %2296 = vmatpush1.bf16.msra.mxu0 %v1514
    %2297 = vmatprep.subr.bf16.mxu0 %v1524
    %2298 = vmatpush1.bf16.msra.mxu0 %v1523
    %2299 = vmatprep.subr.bf16.mxu0 %v1533
    %2300 = vmatpush1.bf16.msra.mxu0 %v1532
    %2301 = vmatprep.subr.bf16.mxu0 %v1542
    %2302 = vmatpush1.bf16.msra.mxu0 %v1541
    %2303 = vmatprep.subr.bf16.mxu0 %v1551
    %2304 = vmatpush1.bf16.msra.mxu0 %v1550
    %2305 = vmatprep.subr.bf16.mxu0 %v1560
    %2306 = vmatpush1.bf16.msra.mxu0 %v1559
    %2307 = vmatprep.subr.bf16.mxu0 %v1569
    %2308 = vmatpush1.bf16.msra.mxu0 %v1568
    %2309 = vmatprep.subr.bf16.mxu0 %v1578
    %2310 = vmatpush1.bf16.msra.mxu0 %v1577
    %2311 = vmatprep.subr.bf16.mxu0 %v1587
    %2312 = vmatpush1.bf16.msra.mxu0 %v1586
    %2313 = vmatprep.subr.bf16.mxu0 %v1596
    %2314 = vmatpush1.bf16.msra.mxu0 %v1595
    %2315 = vmatprep.subr.bf16.mxu0 %v1605
    %2316 = vmatpush1.bf16.msra.mxu0 %v1604
    %2317 = vmatprep.mubr.bf16.mxu0 %v564
    %2318 = vmatmul.mubr.bf16.gmra.mrb[0].mxu0 %v563
    %v2319 = vpop.f32.mrb[0].mxu0
    %v2320 = vadd.f32 0.0, %v2319
    %v2321 = vpop.f32.mrb[0].mxu0
    %v2322 = vadd.f32 0.0, %v2321
    %v2323 = vpop.f32.mrb[0].mxu0
    %v2324 = vpop.f32.mrb[0].mxu0
    %2325 = vdwg.mxu0
    %2326 = vmatprep.subr.bf16.mxu0 %v1614
    %2327 = vmatpush1.bf16.msra.mxu0 %v1613
    %2328 = vmatprep.subr.bf16.mxu0 %v1623
    %2329 = vmatpush1.bf16.msra.mxu0 %v1622
    %2330 = vmatprep.subr.bf16.mxu0 %v1632
    %2331 = vmatpush1.bf16.msra.mxu0 %v1631
    %2332 = vmatprep.subr.bf16.mxu0 %v1641
    %2333 = vmatpush1.bf16.msra.mxu0 %v1640
    %2334 = vmatprep.subr.bf16.mxu0 %v1650
    %2335 = vmatpush1.bf16.msra.mxu0 %v1649
    %2336 = vmatprep.subr.bf16.mxu0 %v1659
    %2337 = vmatpush1.bf16.msra.mxu0 %v1658
    %2338 = vmatprep.subr.bf16.mxu0 %v1668
    %2339 = vmatpush1.bf16.msra.mxu0 %v1667
    %2340 = vmatprep.subr.bf16.mxu0 %v1677
    %2341 = vmatpush1.bf16.msra.mxu0 %v1676
    %2342 = vmatprep.subr.bf16.mxu0 %v1686
    %2343 = vmatpush1.bf16.msra.mxu0 %v1685
    %2344 = vmatprep.subr.bf16.mxu0 %v1695
    %2345 = vmatpush1.bf16.msra.mxu0 %v1694
    %2346 = vmatprep.subr.bf16.mxu0 %v1704
    %2347 = vmatpush1.bf16.msra.mxu0 %v1703
    %2348 = vmatprep.subr.bf16.mxu0 %v1713
    %2349 = vmatpush1.bf16.msra.mxu0 %v1712
    %2350 = vmatprep.subr.bf16.mxu0 %v1722
    %2351 = vmatpush1.bf16.msra.mxu0 %v1721
    %2352 = vmatprep.subr.bf16.mxu0 %v1731
    %2353 = vmatpush1.bf16.msra.mxu0 %v1730
    %2354 = vmatprep.subr.bf16.mxu0 %v1740
    %2355 = vmatpush1.bf16.msra.mxu0 %v1739
    %2356 = vmatprep.subr.bf16.mxu0 %v1749
    %2357 = vmatpush1.bf16.msra.mxu0 %v1748
    %2358 = vmatprep.mubr.bf16.mxu0 %v566
    %2359 = vmatmul.mubr.bf16.gmra.mrb[0].mxu0 %v565
    %v2360 = vpop.f32.mrb[0].mxu0
    %v2361 = vadd.f32 %v2320, %v2360
    %v2362 = vpop.f32.mrb[0].mxu0
    %v2363 = vadd.f32 %v2322, %v2362
    %v2364 = vpop.f32.mrb[0].mxu0
    %v2365 = vpop.f32.mrb[0].mxu0
    %2366 = vdwg.mxu0
    %2367 = vmatprep.subr.bf16.mxu0 0
    %2368 = vmatpush1.bf16.msra.mxu0 %v1471
    %2369 = vmatprep.subr.bf16.mxu0 0
    %2370 = vmatpush1.bf16.msra.mxu0 %v1480
    %2371 = vmatprep.subr.bf16.mxu0 0
    %2372 = vmatpush1.bf16.msra.mxu0 %v1489
    %2373 = vmatprep.subr.bf16.mxu0 0
    %2374 = vmatpush1.bf16.msra.mxu0 %v1498
    %2375 = vmatprep.subr.bf16.mxu0 0
    %2376 = vmatpush1.bf16.msra.mxu0 %v1507
    %2377 = vmatprep.subr.bf16.mxu0 0
    %2378 = vmatpush1.bf16.msra.mxu0 %v1516
    %2379 = vmatprep.subr.bf16.mxu0 0
    %2380 = vmatpush1.bf16.msra.mxu0 %v1525
    %2381 = vmatprep.subr.bf16.mxu0 0
    %2382 = vmatpush1.bf16.msra.mxu0 %v1534
    %2383 = vmatprep.subr.bf16.mxu0 0
    %2384 = vmatpush1.bf16.msra.mxu0 %v1543
    %2385 = vmatprep.subr.bf16.mxu0 0
    %2386 = vmatpush1.bf16.msra.mxu0 %v1552
    %2387 = vmatprep.subr.bf16.mxu0 0
    %2388 = vmatpush1.bf16.msra.mxu0 %v1561
    %2389 = vmatprep.subr.bf16.mxu0 0
    %2390 = vmatpush1.bf16.msra.mxu0 %v1570
    %2391 = vmatprep.subr.bf16.mxu0 0
    %2392 = vmatpush1.bf16.msra.mxu0 %v1579
    %2393 = vmatprep.subr.bf16.mxu0 0
    %2394 = vmatpush1.bf16.msra.mxu0 %v1588
    %2395 = vmatprep.subr.bf16.mxu0 0
    %2396 = vmatpush1.bf16.msra.mxu0 %v1597
    %2397 = vmatprep.subr.bf16.mxu0 0
    %2398 = vmatpush1.bf16.msra.mxu0 %v1606
    %2399 = vmatprep.mubr.bf16.mxu0 %v564
    %2400 = vmatmul.mubr.bf16.gmra.mrb[0].mxu0 %v563
    %v2401 = vpop.f32.mrb[0].mxu0
    %v2402 = vadd.f32 0.0, %v2401
    %v2403 = vpop.f32.mrb[0].mxu0
    %v2404 = vpop.f32.mrb[0].mxu0
    %v2405 = vpop.f32.mrb[0].mxu0
    %2406 = vdwg.mxu0
    %2407 = vmatprep.subr.bf16.mxu0 0
    %2408 = vmatpush1.bf16.msra.mxu0 %v1615
    %2409 = vmatprep.subr.bf16.mxu0 0
    %2410 = vmatpush1.bf16.msra.mxu0 %v1624
    %2411 = vmatprep.subr.bf16.mxu0 0
    %2412 = vmatpush1.bf16.msra.mxu0 %v1633
    %2413 = vmatprep.subr.bf16.mxu0 0
    %2414 = vmatpush1.bf16.msra.mxu0 %v1642
    %2415 = vmatprep.subr.bf16.mxu0 0
    %2416 = vmatpush1.bf16.msra.mxu0 %v1651
    %2417 = vmatprep.subr.bf16.mxu0 0
    %2418 = vmatpush1.bf16.msra.mxu0 %v1660
    %2419 = vmatprep.subr.bf16.mxu0 0
    %2420 = vmatpush1.bf16.msra.mxu0 %v1669
    %2421 = vmatprep.subr.bf16.mxu0 0
    %2422 = vmatpush1.bf16.msra.mxu0 %v1678
    %2423 = vmatprep.subr.bf16.mxu0 0
    %2424 = vmatpush1.bf16.msra.mxu0 %v1687
    %2425 = vmatprep.subr.bf16.mxu0 0
    %2426 = vmatpush1.bf16.msra.mxu0 %v1696
    %2427 = vmatprep.subr.bf16.mxu0 0
    %2428 = vmatpush1.bf16.msra.mxu0 %v1705
    %2429 = vmatprep.subr.bf16.mxu0 0
    %2430 = vmatpush1.bf16.msra.mxu0 %v1714
    %2431 = vmatprep.subr.bf16.mxu0 0
    %2432 = vmatpush1.bf16.msra.mxu0 %v1723
    %2433 = vmatprep.subr.bf16.mxu0 0
    %2434 = vmatpush1.bf16.msra.mxu0 %v1732
    %2435 = vmatprep.subr.bf16.mxu0 0
    %2436 = vmatpush1.bf16.msra.mxu0 %v1741
    %2437 = vmatprep.subr.bf16.mxu0 0
    %2438 = vmatpush1.bf16.msra.mxu0 %v1750
    %2439 = vmatprep.mubr.bf16.mxu0 %v566
    %2440 = vmatmul.mubr.bf16.gmra.mrb[0].mxu0 %v565
    %v2441 = vpop.f32.mrb[0].mxu0
    %v2442 = vadd.f32 %v2402, %v2441
    %v2443 = vpop.f32.mrb[0].mxu0
    %v2444 = vpop.f32.mrb[0].mxu0
    %v2445 = vpop.f32.mrb[0].mxu0
    %2446 = vdwg.mxu0
    %v2447 = vpack.c.bf16 %v2115, %v2115
    %v2448 = vpack.c.bf16 %v2117, %v2117
    %v2449 = vpack.c.bf16 %v2197, %v2197
    %v2450 = vpack.c.bf16 %v2199, %v2199
    %v2451 = vpack.c.bf16 %v2279, %v2279
    %v2452 = vpack.c.bf16 %v2281, %v2281
    %v2453 = vpack.c.bf16 %v2361, %v2361
    %v2454 = vpack.c.bf16 %v2363, %v2363
    %v2455 = vpack.c.bf16 %v2442, %v2442
    %v2457 = vrot.slane %v2448, 6
    %v2459 = vrot.slane %v2449, 4
    %v2461 = vrot.slane %v2450, 2
    %v2463 = vrot.slane %v2452, 6
    %v2465 = vrot.slane %v2453, 4
    %v2467 = vrot.slane %v2454, 2
    %vm2468 = vcmask 1041408
    %v2471 = vsel %vm2468, %v2447, %v2457
    %v2473 = vsel %vm412, %v2471, %v2459
    %vm2474 = vcmask 1045504
    %v2476 = vsel %vm2474, %v2473, %v2461
    %v2480 = vsel %vm2468, %v2451, %v2463
    %v2482 = vsel %vm412, %v2480, %v2465
    %v2484 = vsel %vm2474, %v2482, %v2467
    %v2486 = vld [vmem:[#allocation8] sm:$0x3]
    %vm2487 = vcmask 293888
    %v2489 = vsel %vm2487, %v2486, 0
    %v2492 = vsel %vm2468, %v2455, 0
    %2494 = vmatprep.subr.bf16.mxu0 0
    %2495 = vmatpush1.bf16.msra.mxu0 %v2476
    %2496 = vmatprep.subr.bf16.mxu0 0
    %2497 = vmatpush1.bf16.msra.mxu0 %v2484
    %2498 = vmatprep.subr.bf16.mxu0 0
    %2499 = vmatpush1.bf16.msra.mxu0 %v2492
    %2500 = vmatprep.subr.bf16.mxu0 0
    %2501 = vmatpush1.bf16.msra.mxu0 0
    %2502 = vmatprep.subr.bf16.mxu0 0
    %2503 = vmatpush1.bf16.msra.mxu0 0
    %2504 = vmatprep.subr.bf16.mxu0 0
    %2505 = vmatpush1.bf16.msra.mxu0 0
    %2506 = vmatprep.subr.bf16.mxu0 0
    %2507 = vmatpush1.bf16.msra.mxu0 0
    %2508 = vmatprep.subr.bf16.mxu0 0
    %2509 = vmatpush1.bf16.msra.mxu0 0
    %2510 = vmatprep.subr.bf16.mxu0 0
    %2511 = vmatpush1.bf16.msra.mxu0 0
    %2512 = vmatprep.subr.bf16.mxu0 0
    %2513 = vmatpush1.bf16.msra.mxu0 0
    %2514 = vmatprep.subr.bf16.mxu0 0
    %2515 = vmatpush1.bf16.msra.mxu0 0
    %2516 = vmatprep.subr.bf16.mxu0 0
    %2517 = vmatpush1.bf16.msra.mxu0 0
    %2518 = vmatprep.subr.bf16.mxu0 0
    %2519 = vmatpush1.bf16.msra.mxu0 0
    %2520 = vmatprep.subr.bf16.mxu0 0
    %2521 = vmatpush1.bf16.msra.mxu0 0
    %2522 = vmatprep.subr.bf16.mxu0 0
    %2523 = vmatpush1.bf16.msra.mxu0 0
    %2524 = vmatprep.subr.bf16.mxu0 0
    %2525 = vmatpush1.bf16.msra.mxu0 0
    %2526 = vmatprep.mubr.bf16.mxu0 0
    %2527 = vmatmul.mubr.bf16.gmra.mrb[0].mxu0 %v2489
    %v2528 = vpop.f32.mrb[0].mxu0
    %v2529 = vadd.f32 0.0, %v2528
    %v2530 = vpop.f32.mrb[0].mxu0
    %v2531 = vpop.f32.mrb[0].mxu0
    %v2532 = vpop.f32.mrb[0].mxu0
    %2533 = vdwg.mxu0
    %v2534 = vsel %vm412, %v2529, 0.0
    %2535 = vadd.xlane.f32.xlu0 %v2534
    %v2536 = vpop.xlane.xlu0 %2535
    %v2537 = vrcp.pop 128.0
    %v2538 = vmul.f32 %v2536, %v2537
    %v2539 = vsub.f32 %v2529, %v2538
    %v2540 = vmul.f32 %v2539, %v2539
    %v2541 = vsel %vm412, %v2540, 0.0
    %2542 = vadd.xlane.f32.xlu0 %v2541
    %v2543 = vpop.xlane.xlu0 %2542
    %v2544 = vmul.f32 %v2543, %v2537
    %v2545 = vadd.f32 %v2544, 1e-05
    %v2546 = vrsqrt.pop %v2545
    %v2547 = vmul.f32 %v2539, %v2546
    %v2548 = vrot.slane %v545, 4
    %v2550 = vmul.f32 %v2547, %v2548
    %v2551 = vrot.slane %v553, 4
    %v2553 = vadd.f32 %v2550, %v2551
    %v2554 = vmax.f32 %v2553, 0.0
    %v2555 = vpack.c.bf16 %v2554, %v2554
    %2556 = vmatprep.subr.bf16.mxu0 0
    %2557 = vmatpush1.bf16.msra.mxu0 %v1467
    %2558 = vmatprep.subr.bf16.mxu0 0
    %2559 = vmatpush1.bf16.msra.mxu0 %v1476
    %2560 = vmatprep.subr.bf16.mxu0 0
    %2561 = vmatpush1.bf16.msra.mxu0 %v1485
    %2562 = vmatprep.subr.bf16.mxu0 0
    %2563 = vmatpush1.bf16.msra.mxu0 %v1494
    %2564 = vmatprep.subr.bf16.mxu0 0
    %2565 = vmatpush1.bf16.msra.mxu0 %v1503
    %2566 = vmatprep.subr.bf16.mxu0 0
    %2567 = vmatpush1.bf16.msra.mxu0 %v1512
    %2568 = vmatprep.subr.bf16.mxu0 0
    %2569 = vmatpush1.bf16.msra.mxu0 %v1521
    %2570 = vmatprep.subr.bf16.mxu0 0
    %2571 = vmatpush1.bf16.msra.mxu0 %v1530
    %2572 = vmatprep.subr.bf16.mxu0 0
    %2573 = vmatpush1.bf16.msra.mxu0 %v1539
    %2574 = vmatprep.subr.bf16.mxu0 0
    %2575 = vmatpush1.bf16.msra.mxu0 %v1548
    %2576 = vmatprep.subr.bf16.mxu0 0
    %2577 = vmatpush1.bf16.msra.mxu0 %v1557
    %2578 = vmatprep.subr.bf16.mxu0 0
    %2579 = vmatpush1.bf16.msra.mxu0 %v1566
    %2580 = vmatprep.subr.bf16.mxu0 0
    %2581 = vmatpush1.bf16.msra.mxu0 %v1575
    %2582 = vmatprep.subr.bf16.mxu0 0
    %2583 = vmatpush1.bf16.msra.mxu0 %v1584
    %2584 = vmatprep.subr.bf16.mxu0 0
    %2585 = vmatpush1.bf16.msra.mxu0 %v1593
    %2586 = vmatprep.subr.bf16.mxu0 0
    %2587 = vmatpush1.bf16.msra.mxu0 %v1602
    %2588 = vmatprep.mubr.bf16.mxu0 %v84
    %2589 = vmatmul.mubr.bf16.gmra.mrb[0].mxu0 %v83
    %v2590 = vpop.f32.mrb[0].mxu0
    %v2591 = vadd.f32 0.0, %v2590
    %v2592 = vpop.f32.mrb[0].mxu0
    %v2593 = vpop.f32.mrb[0].mxu0
    %v2594 = vpop.f32.mrb[0].mxu0
    %2595 = vdwg.mxu0
    %2596 = vmatprep.subr.bf16.mxu0 0
    %2597 = vmatpush1.bf16.msra.mxu0 %v1611
    %2598 = vmatprep.subr.bf16.mxu0 0
    %2599 = vmatpush1.bf16.msra.mxu0 %v1620
    %2600 = vmatprep.subr.bf16.mxu0 0
    %2601 = vmatpush1.bf16.msra.mxu0 %v1629
    %2602 = vmatprep.subr.bf16.mxu0 0
    %2603 = vmatpush1.bf16.msra.mxu0 %v1638
    %2604 = vmatprep.subr.bf16.mxu0 0
    %2605 = vmatpush1.bf16.msra.mxu0 %v1647
    %2606 = vmatprep.subr.bf16.mxu0 0
    %2607 = vmatpush1.bf16.msra.mxu0 %v1656
    %2608 = vmatprep.subr.bf16.mxu0 0
    %2609 = vmatpush1.bf16.msra.mxu0 %v1665
    %2610 = vmatprep.subr.bf16.mxu0 0
    %2611 = vmatpush1.bf16.msra.mxu0 %v1674
    %2612 = vmatprep.subr.bf16.mxu0 0
    %2613 = vmatpush1.bf16.msra.mxu0 %v1683
    %2614 = vmatprep.subr.bf16.mxu0 0
    %2615 = vmatpush1.bf16.msra.mxu0 %v1692
    %2616 = vmatprep.subr.bf16.mxu0 0
    %2617 = vmatpush1.bf16.msra.mxu0 %v1701
    %2618 = vmatprep.subr.bf16.mxu0 0
    %2619 = vmatpush1.bf16.msra.mxu0 %v1710
    %2620 = vmatprep.subr.bf16.mxu0 0
    %2621 = vmatpush1.bf16.msra.mxu0 %v1719
    %2622 = vmatprep.subr.bf16.mxu0 0
    %2623 = vmatpush1.bf16.msra.mxu0 %v1728
    %2624 = vmatprep.subr.bf16.mxu0 0
    %2625 = vmatpush1.bf16.msra.mxu0 %v1737
    %2626 = vmatprep.subr.bf16.mxu0 0
    %2627 = vmatpush1.bf16.msra.mxu0 %v1746
    %2628 = vmatprep.mubr.bf16.mxu0 %v86
    %2629 = vmatmul.mubr.bf16.gmra.mrb[0].mxu0 %v85
    %v2630 = vpop.f32.mrb[0].mxu0
    %v2631 = vadd.f32 %v2591, %v2630
    %v2632 = vpop.f32.mrb[0].mxu0
    %v2633 = vpop.f32.mrb[0].mxu0
    %v2634 = vpop.f32.mrb[0].mxu0
    %2635 = vdwg.mxu0
    %v2636 = vpack.c.bf16 %v2631, %v2631
    %v2638 = vrot.slane %v2636, 6
    %v2641 = vsel %vm2468, %v2555, %v2638
    %v2642 = vld [vmem:[%s4] sm:$0xf]
    %v2643 = vld [vmem:[%s4 + $0x4] sm:$0xf]
    %v2644 = vld [vmem:[%s4 + $0x8] sm:$0xf]
    %v2645 = vld [vmem:[%s4 + $0xc] sm:$0xf]
    %v2650 = vunpack.c.l.b16 %v2642
    %v2651 = vunpack.c.l.b16 %v2643
    %v2652 = vunpack.c.l.b16 %v2644
    %v2653 = vunpack.c.l.b16 %v2645
    %v2654 = vpack.c.b16 %v2651, %v2650
    %v2655 = vpack.c.b16 %v2653, %v2652
    %vm2656 = vcmask 97280
    %v2658 = vsel %vm2656, %v2654, 0
    %v2661 = vsel %vm2656, %v2655, 0
    %v2663 = vsel %vm2474, %v2641, 0
    %2665 = vmatprep.subr.bf16.mxu0 0
    %2666 = vmatpush1.bf16.msra.mxu0 %v2663
    %2667 = vmatprep.subr.bf16.mxu0 0
    %2668 = vmatpush1.bf16.msra.mxu0 0
    %2669 = vmatprep.subr.bf16.mxu0 0
    %2670 = vmatpush1.bf16.msra.mxu0 0
    %2671 = vmatprep.subr.bf16.mxu0 0
    %2672 = vmatpush1.bf16.msra.mxu0 0
    %2673 = vmatprep.subr.bf16.mxu0 0
    %2674 = vmatpush1.bf16.msra.mxu0 0
    %2675 = vmatprep.subr.bf16.mxu0 0
    %2676 = vmatpush1.bf16.msra.mxu0 0
    %2677 = vmatprep.subr.bf16.mxu0 0
    %2678 = vmatpush1.bf16.msra.mxu0 0
    %2679 = vmatprep.subr.bf16.mxu0 0
    %2680 = vmatpush1.bf16.msra.mxu0 0
    %2681 = vmatprep.subr.bf16.mxu0 0
    %2682 = vmatpush1.bf16.msra.mxu0 0
    %2683 = vmatprep.subr.bf16.mxu0 0
    %2684 = vmatpush1.bf16.msra.mxu0 0
    %2685 = vmatprep.subr.bf16.mxu0 0
    %2686 = vmatpush1.bf16.msra.mxu0 0
    %2687 = vmatprep.subr.bf16.mxu0 0
    %2688 = vmatpush1.bf16.msra.mxu0 0
    %2689 = vmatprep.subr.bf16.mxu0 0
    %2690 = vmatpush1.bf16.msra.mxu0 0
    %2691 = vmatprep.subr.bf16.mxu0 0
    %2692 = vmatpush1.bf16.msra.mxu0 0
    %2693 = vmatprep.subr.bf16.mxu0 0
    %2694 = vmatpush1.bf16.msra.mxu0 0
    %2695 = vmatprep.subr.bf16.mxu0 0
    %2696 = vmatpush1.bf16.msra.mxu0 0
    %2697 = vmatprep.mubr.bf16.mxu0 0
    %2698 = vmatmul.mubr.bf16.gmra.mrb[0].mxu0 %v2658
    %v2699 = vpop.f32.mrb[0].mxu0
    %v2700 = vadd.f32 0.0, %v2699
    %v2701 = vpop.f32.mrb[0].mxu0
    %v2702 = vpop.f32.mrb[0].mxu0
    %v2703 = vadd.f32 0.0, %v2702
    %v2704 = vpop.f32.mrb[0].mxu0
    %2705 = vmatprep.mubr.bf16.mxu0 0
    %2706 = vmatmul.mubr.bf16.gmra.mrb[0].mxu0 %v2661
    %v2707 = vpop.f32.mrb[0].mxu0
    %v2708 = vadd.f32 0.0, %v2707
    %v2709 = vpop.f32.mrb[0].mxu0
    %v2710 = vpop.f32.mrb[0].mxu0
    %v2711 = vadd.f32 0.0, %v2710
    %v2712 = vpop.f32.mrb[0].mxu0
    %2713 = vdwg.mxu0
    %2714 = vadd.xlane.f32.xlu0 %v2700
    %v2715 = vpop.xlane.xlu0 %2714
    %2716 = vadd.xlane.f32.xlu0 %v2703
    %v2717 = vpop.xlane.xlu0 %2716
    %2718 = vadd.xlane.f32.xlu0 %v2708
    %v2719 = vpop.xlane.xlu0 %2718
    %2720 = vadd.xlane.f32.xlu0 %v2711
    %v2721 = vpop.xlane.xlu0 %2720
    %v2722 = vmul.f32 %v2715, %v2537
    %v2723 = vmul.f32 %v2717, %v2537
    %v2724 = vmul.f32 %v2719, %v2537
    %v2725 = vmul.f32 %v2721, %v2537
    %v2726 = vsub.f32 %v2700, %v2722
    %v2727 = vsub.f32 %v2703, %v2723
    %v2728 = vsub.f32 %v2708, %v2724
    %v2729 = vsub.f32 %v2711, %v2725
    %v2730 = vmul.f32 %v2726, %v2726
    %v2731 = vmul.f32 %v2727, %v2727
    %v2732 = vmul.f32 %v2728, %v2728
    %v2733 = vmul.f32 %v2729, %v2729
    %2734 = vadd.xlane.f32.xlu0 %v2730
    %v2735 = vpop.xlane.xlu0 %2734
    %2736 = vadd.xlane.f32.xlu0 %v2731
    %v2737 = vpop.xlane.xlu0 %2736
    %2738 = vadd.xlane.f32.xlu0 %v2732
    %v2739 = vpop.xlane.xlu0 %2738
    %2740 = vadd.xlane.f32.xlu0 %v2733
    %v2741 = vpop.xlane.xlu0 %2740
    %v2742 = vmul.f32 %v2735, %v2537
    %v2743 = vmul.f32 %v2737, %v2537
    %v2744 = vmul.f32 %v2739, %v2537
    %v2745 = vmul.f32 %v2741, %v2537
    %v2746 = vadd.f32 %v2742, 1e-05
    %v2747 = vadd.f32 %v2743, 1e-05
    %v2748 = vadd.f32 %v2744, 1e-05
    %v2749 = vadd.f32 %v2745, 1e-05
    %v2750 = vrsqrt.pop %v2746
    %v2751 = vrsqrt.pop %v2747
    %v2752 = vrsqrt.pop %v2748
    %v2753 = vrsqrt.pop %v2749
    %v2754 = vmul.f32 %v2726, %v2750
    %v2755 = vmul.f32 %v2727, %v2751
    %v2756 = vmul.f32 %v2728, %v2752
    %v2757 = vmul.f32 %v2729, %v2753
    %2759 = vset.pattern.permute.xlu0 0
    %2760 = vperm.xlu0 %2759, %v75
    %v2761 = vpop.permute.xlu0 %2760
    %2764 = vset.pattern.permute.xlu0 0
    %2765 = vperm.xlu0 %2764, %v76
    %v2766 = vpop.permute.xlu0 %2765
    %2769 = vset.pattern.permute.xlu0 0
    %2770 = vperm.xlu0 %2769, %v77
    %v2771 = vpop.permute.xlu0 %2770
    %2774 = vset.pattern.permute.xlu0 0
    %2775 = vperm.xlu0 %2774, %v78
    %v2776 = vpop.permute.xlu0 %2775
    %v2778 = vmul.f32 %v2754, %v2761
    %v2779 = vmul.f32 %v2755, %v2766
    %v2780 = vmul.f32 %v2756, %v2771
    %v2781 = vmul.f32 %v2757, %v2776
    %2782 = vset.pattern.permute.xlu0 1
    %2783 = vperm.xlu0 %2782, %v75
    %v2784 = vpop.permute.xlu0 %2783
    %2786 = vset.pattern.permute.xlu0 1
    %2787 = vperm.xlu0 %2786, %v76
    %v2788 = vpop.permute.xlu0 %2787
    %2790 = vset.pattern.permute.xlu0 1
    %2791 = vperm.xlu0 %2790, %v77
    %v2792 = vpop.permute.xlu0 %2791
    %2794 = vset.pattern.permute.xlu0 1
    %2795 = vperm.xlu0 %2794, %v78
    %v2796 = vpop.permute.xlu0 %2795
    %v2798 = vadd.f32 %v2778, %v2784
    %v2799 = vadd.f32 %v2779, %v2788
    %v2800 = vadd.f32 %v2780, %v2792
    %v2801 = vadd.f32 %v2781, %v2796
    %v2802 = vadd.f32 %v2798, %v2800
    %v2803 = vadd.f32 %v2799, %v2801
    %v2804 = vmax.f32 %v2802, 0.0
    %v2805 = vmax.f32 %v2803, 0.0
    %2806 = vst [vmem:[#allocation10] sm:$0xff] %v2804
    %2807 = vst [vmem:[#allocation10 + $0x8] sm:$0xff] %v2805
    // Predicated region
    $region42: #{tpu_custom_call.1} parent=1 // pred_check
      _
    $region43: #{tpu_custom_call.1} parent=1 // pred_check_branch
      %2809 = sbr.rel (0) target = $region45
    $region44: #{tpu_custom_call.1} parent=1 // pred_region
      %s2811 = ssub.s32 256, 256
      %2812 = vsyncadd [#allocation4], %s2811
      %s2813 = sshll.u32 [#allocation10], 4
      %s2814 = int_to_ptr.vmem [resolvable:$true] %s2813
      %2819 = dma.vmem_to_hbm [thread:$0]  %s2814, 256, %s6, [#allocation4], 128, 128, 8
    $region45: #{tpu_custom_call.1} parent=1 // pred_fallthru
      _
    // Predicated region
    $region46: #{tpu_custom_call.1} parent=1 // pred_check
      _
    $region47: #{tpu_custom_call.1} parent=1 // pred_check_branch
      %2821 = sbr.rel (0) target = $region49
    $region48: #{tpu_custom_call.1} parent=1 // pred_region
      %2822 = dma.done [#allocation4], 256
    $region49: #{tpu_custom_call.1} parent=1 // pred_fallthru
      _
    %2823 = vsyncpa [#allocation3], 1
    %2824 = vsyncpa [#allocation6], 1
    %2825 = vsyncpa [#allocation9], 1
    %2826 = vsyncpa [#allocation4], 1

</llo_original>
